<compile_context>
chip_gen: v7x
topology: tpu7x:2x2x1
jax: 0.10.0
libtpu: 0.0.40
codegen_flags: <defaults>
</compile_context>

<pallas_src>
import functools

import jax
import jax.numpy as jnp
from jax.experimental import pallas as pl
from jax.experimental.pallas import tpu as pltpu

_LN_EPS = 1e-5
_BN_EPS = 1e-5
_LANE = 128


def _round_up(n, m):
    return ((n + m - 1) // m) * m


def _erf(z):
    # Abramowitz & Stegun 7.1.26, |abs err| < 1.5e-7 -- matches torch's exact
    # (erf-based) GELU far below the 1e-5 test tolerance.  The divide goes through
    # pl.reciprocal so it lands on the EUP instead of the saturated VALU slot.
    a1, a2, a3, a4, a5 = (0.254829592, -0.284496736, 1.421413741,
                          -1.453152027, 1.061405429)
    p = 0.3275911
    az = jnp.abs(z)
    t = pl.reciprocal(1.0 + p * az, approx=False)
    poly = ((((a5 * t + a4) * t + a3) * t + a2) * t + a1) * t
    r = 1.0 - poly * jnp.exp(-az * az)
    return jnp.where(z >= 0.0, r, -r)


def _gelu_exact(x):
    return 0.5 * x * (1.0 + _erf(x * 0.7071067811865476))


def _cla_kernel(kernel_size, halo_l, t_tile, t_real, c_real, inv_c, need_mask,
                mm_dtype,
                x_ref, ln_g, ln_b, w1, b1, wdw, bdw, w2, b2, w3, b3, o_ref):
    xw = x_ref[0, 0]                                   # (tW, Cp) f32 halo'd window
    tW, Cp = xw.shape

    # ---- LayerNorm over the real C channels (two-pass variance; padded lanes are
    #      excluded from the moments; gamma/beta are zero-padded) ----
    mu = jnp.sum(xw, axis=-1, keepdims=True) * inv_c
    if Cp != c_real:
        lane = jax.lax.broadcasted_iota(jnp.int32, (1, Cp), 1)
        d = xw - jnp.where(lane < c_real, mu, 0.0)     # keep padded lanes exactly 0
    else:
        d = xw - mu
    var = jnp.sum(d * d, axis=-1, keepdims=True) * inv_c
    y = d * jax.lax.rsqrt(var + _LN_EPS) * ln_g[...] + ln_b[...]

    # ---- linear1 (single fused C -> 2C dot) + GLU; sigmoid via tanh (EUP) ----
    h = jnp.dot(y.astype(mm_dtype), w1[...],
                preferred_element_type=jnp.float32) + b1[...]
    y = h[:, :Cp] * (0.5 * jnp.tanh(0.5 * h[:, Cp:]) + 0.5)

    # Window rows outside the real sequence must contribute zeros to the conv
    # ('same' zero padding); their post-LN/GLU value is a nonzero bias, so mask.
    if need_mask:
        row = jax.lax.broadcasted_iota(jnp.int32, (tW, 1), 0)
        gidx = pl.program_id(1) * t_tile + row - halo_l
        y = jnp.where(jnp.logical_and(gidx >= 0, gidx < t_real), y, 0.0)

    # ---- depthwise Conv1d along T (halo rows supply the 'same' padding) ----
    acc = y[0:t_tile, :] * wdw[0]
    for k in range(1, kernel_size):                    # K static & small
        acc = acc + y[k:k + t_tile, :] * wdw[k]        # wdw[k] -> (1, Cp)
    y = acc + bdw[...]

    # ---- linear2 (BatchNorm folded) -> GELU -> linear3 (LayerScale folded) ----
    y = jnp.dot(y.astype(mm_dtype), w2[...],
                preferred_element_type=jnp.float32) + b2[...]
    y = _gelu_exact(y)
    y = jnp.dot(y.astype(mm_dtype), w3[...],
                preferred_element_type=jnp.float32) + b3[...]

    # ---- residual (Dropout == identity): re-read the tile's center rows ----
    x_mid = x_ref[0, 0]                                # short live range
    o_ref[0] = x_mid[halo_l:halo_l + t_tile, :] + y


def _pad_last(a, width):
    pad = width - a.shape[-1]
    if pad == 0:
        return a
    return jnp.pad(a, [(0, 0)] * (a.ndim - 1) + [(0, pad)])


def _pad2(a, rows, cols):
    return jnp.pad(a, [(0, rows - a.shape[0]), (0, cols - a.shape[1])])


def cla_forward(x, params, kernel_size, *, matmul_dtype=jnp.float32,
                seq_tile=None):
    """x: (B, T, C) float32.  params: PyTorch-shaped weight dict (eval mode).

    matmul_dtype=jnp.bfloat16 enables the fast MXU path on v6e/v7x (does NOT meet
    the 1e-5 test tolerance, so it is off by default).
    """
    B, T, C = x.shape
    C2 = 2 * C
    f32 = jnp.float32
    K = int(kernel_size)
    Cp = _round_up(C, _LANE)           # lane-dense channel dim
    Hp = _round_up(C2, _LANE)          # lane-dense hidden (2C) dim
    hl = (K - 1) // 2                  # conv halo ('same' padding split)
    hr = (K - 1) - hl

    row = lambda a, w: _pad_last(jnp.asarray(a, f32).reshape(1, -1), w)

    # ---------- host-side weight folding + zero padding to lane multiples ----------
    w1 = jnp.asarray(params["w1"], f32)                         # (2C, C)
    b1 = jnp.asarray(params["b1"], f32)
    w1p = jnp.concatenate([_pad2(w1[:C].T, Cp, Cp),             # GLU value half
                           _pad2(w1[C:].T, Cp, Cp)], axis=1)    # GLU gate  half
    b1p = jnp.concatenate([row(b1[:C], Cp), row(b1[C:], Cp)], axis=1)

    w_dw = _pad2(jnp.asarray(params["w_dw"], f32)[:, 0, :].T, K, Cp)
    w_dw = w_dw.reshape(K, 1, Cp)
    b_dw = row(params["b_dw"], Cp)

    # BatchNorm1d (eval: running stats) folded into linear2.
    bn_scale = (jnp.asarray(params["bn_g"], f32) *
                jax.lax.rsqrt(jnp.asarray(params["bn_var"], f32) + _BN_EPS))
    w2f = _pad2(jnp.asarray(params["w2"], f32).T * bn_scale[None, :], Cp, Hp)
    b2f = row((jnp.asarray(params["b2"], f32) - jnp.asarray(params["bn_mean"], f32))
              * bn_scale + jnp.asarray(params["bn_b"], f32), Hp)

    # LayerScale folded into linear3.
    ls = jnp.asarray(params["ls"], f32).reshape(-1)
    w3f = _pad2(jnp.asarray(params["w3"], f32).T * ls[None, :], Hp, Cp)
    b3f = row(jnp.asarray(params["b3"], f32) * ls, Cp)

    ln_g = row(params["ln_g"], Cp)
    ln_b = row(params["ln_b"], Cp)

    # Optional bf16 matmul path (weights stored narrow, f32 accumulation).
    w1p = w1p.astype(matmul_dtype)
    w2f = w2f.astype(matmul_dtype)
    w3f = w3f.astype(matmul_dtype)

    weights = (ln_g, ln_b, w1p, b1p, w_dw, b_dw, w2f, b2f, w3f, b3f)
    wbytes = sum(int(a.size) * a.dtype.itemsize for a in weights)

    # ---------- generation-aware VMEM budget & T-tile selection ----------
    try:
        vmem_cap = int(pltpu.get_tpu_info().vmem_capacity_bytes)
    except Exception:
        vmem_cap = 64 << 20                             # conservative (v7x)

    def vmem_est(tt, w_rep):
        tw = tt + K - 1
        act_blocks = 4 * 2 * (tw + tt) * Cp             # double-buffered in/out
        temps = 4 * (tw * 3 * Cp + tt * (Hp + Cp))      # live (tW,2Cp)/(tW,Cp)/...
        return act_blocks + w_rep * wbytes + temps

    t_max = _round_up(T, 8)
    if seq_tile is not None:
        tT = max(8, _round_up(min(int(seq_tile), t_max), 8))
    else:
        budget = max(8 << 20, min(24 << 20, vmem_cap // 3))
        tT = min(512, t_max)
        while tT > 64 and vmem_est(tT, 2) > budget:
            tT = max(64, (tT // 2 // 8) * 8)
    tT = min(tT, t_max)
    nT = pl.cdiv(T, tT)
    Tr = nT * tT
    tW = tT + K - 1
    need_mask = (K > 1) or (Tr != T)

    # ---------- host-side window gather (conv halo baked into each T tile) ----------
    xp = _pad_last(jnp.asarray(x, f32), Cp)                      # (B, T, Cp)
    xpad = jnp.pad(xp, ((0, 0), (hl, (Tr - T) + hr), (0, 0)))    # zero 'same' padding
    win_idx = jnp.arange(nT)[:, None] * tT + jnp.arange(tW)[None, :]
    xwin = xpad[:, win_idx, :]                                   # (B, nT, tW, Cp)

    kern = functools.partial(_cla_kernel, K, hl, tT, T, C, 1.0 / C, need_mask,
                             matmul_dtype)

    x_spec = pl.BlockSpec((1, 1, tW, Cp), lambda b, t: (b, t, 0, 0))
    out_spec = pl.BlockSpec((1, tT, Cp), lambda b, t: (b, t, 0))

    n_rows = B * Tr
    cost = pl.CostEstimate(
        flops=int(2 * B * nT * (tW * Cp * 2 * Cp + tT * Cp * Hp + tT * Hp * Cp)
                  + 40 * n_rows * (Cp + Hp)),
        transcendentals=int(n_rows * (Cp + Hp)),
        bytes_accessed=int(4 * (B * nT * tW * Cp + n_rows * Cp) + wbytes),
    )

    cp_kwargs = dict(dimension_semantics=("parallel", "parallel"))
    need = vmem_est(tT, 2)
    if need > (16 << 20):
        upper = max(vmem_cap - (16 << 20), 32 << 20)    # leave compiler headroom
        cp_kwargs["vmem_limit_bytes"] = int(min(need + (2 << 20), upper))

    def run(single_buffer_weights):
        w_kw = {}
        if single_buffer_weights:
            w_kw["pipeline_mode"] = pl.Buffered(1)      # grid-invariant weights

        def const_spec(a):
            return pl.BlockSpec(a.shape, lambda b, t, _n=a.ndim: (0,) * _n, **w_kw)

        return pl.pallas_call(
            kern,
            out_shape=jax.ShapeDtypeStruct((B, Tr, Cp), f32),
            grid=(B, nT),
            in_specs=[x_spec] + [const_spec(a) for a in weights],
            out_specs=out_spec,
            compiler_params=pltpu.CompilerParams(**cp_kwargs),
            cost_estimate=cost,
        )(xwin, *weights)

    try:
        out = jax.block_until_ready(run(True))
    except Exception:
        out = run(False)                 # fallback: default double-buffered weights

    return out[:, :T, :C]


def cla_reference(x, params, kernel_size):
    """Plain-JAX mirror of the PyTorch CLA.forward (eval mode)."""
    B, T, C = x.shape
    mu = x.mean(-1, keepdims=True)
    var = ((x - mu) ** 2).mean(-1, keepdims=True)
    y = (x - mu) / jnp.sqrt(var + _LN_EPS) * params["ln_g"] + params["ln_b"]
    y = y @ params["w1"].T + params["b1"]
    a, g = y[..., :C], y[..., C:]
    y = a * jax.nn.sigmoid(g)
    K = kernel_size
    left = (K - 1) // 2
    yp = jnp.pad(y, ((0, 0), (left, K - 1 - left), (0, 0)))
    w = params["w_dw"][:, 0, :]                           # (C, K)
    y = sum(yp[:, k:k + T, :] * w[:, k] for k in range(K)) + params["b_dw"]
    y = y @ params["w2"].T + params["b2"]
    y = ((y - params["bn_mean"]) / jnp.sqrt(params["bn_var"] + _BN_EPS)
         * params["bn_g"] + params["bn_b"])
    y = jax.nn.gelu(y, approximate=False)
    y = y @ params["w3"].T + params["b3"]
    return x + y * params["ls"]


if __name__ == "__main__":
    B, T, C, K = 2, 16, 8, 3      # batch, seq, in_channels, conv kernel_size
    C2 = 2 * C
    keys = jax.random.split(jax.random.PRNGKey(0), 16)

    def u(k, shape, scale=0.5):
        return jax.random.uniform(k, shape, jnp.float32, -scale, scale)

    params = dict(
        ln_g=1.0 + u(keys[0], (C,), 0.1),
        ln_b=u(keys[1], (C,), 0.1),
        w1=u(keys[2], (C2, C)),
        b1=u(keys[3], (C2,)),
        w_dw=u(keys[4], (C, 1, K)),          # Conv1d(groups=C) weight
        b_dw=u(keys[5], (C,)),
        w2=u(keys[6], (C2, C)),
        b2=u(keys[7], (C2,)),
        bn_g=1.0 + u(keys[8], (C2,), 0.1),
        bn_b=u(keys[9], (C2,), 0.1),
        bn_mean=u(keys[10], (C2,), 0.1),     # running_mean buffer
        bn_var=jax.random.uniform(keys[11], (C2,), jnp.float32, 0.5, 1.5),
        w3=u(keys[12], (C, C2)),
        b3=u(keys[13], (C,)),
        ls=jnp.full((C,), 1e-5, jnp.float32),   # LayerScale init 1e-5
    )
    x = jax.random.normal(keys[14], (B, T, C), jnp.float32)

    ref = cla_reference(x, params, K)

    # Default (single T tile at this tiny length).
    out = cla_forward(x, params, K)
    jax.block_until_ready(out)
    assert out.shape == (B, T, C)
    err = float(jnp.max(jnp.abs(out - ref)))
    assert jnp.allclose(out, ref, atol=1e-5, rtol=1e-5), err

    # Force the T-tiled (halo) path: two tiles of 8 rows each.
    out_t = cla_forward(x, params, K, seq_tile=8)
    jax.block_until_ready(out_t)
    err_t = float(jnp.max(jnp.abs(out_t - ref)))
    assert jnp.allclose(out_t, ref, atol=1e-5, rtol=1e-5), err_t

    print("KERNEL_OK")
</pallas_src>

<mosaic_0001>
module attributes {stable_mosaic.version = 11 : i64} {
  func.func @_cla_kernel(%arg0: i32, %arg1: i32, %arg2: memref<1x1x18x128xf32, #tpu.memory_space<vmem>>, %arg3: memref<1x128xf32, #tpu.memory_space<vmem>>, %arg4: memref<1x128xf32, #tpu.memory_space<vmem>>, %arg5: memref<128x256xf32, #tpu.memory_space<vmem>>, %arg6: memref<1x256xf32, #tpu.memory_space<vmem>>, %arg7: memref<3x1x128xf32, #tpu.memory_space<vmem>>, %arg8: memref<1x128xf32, #tpu.memory_space<vmem>>, %arg9: memref<128x128xf32, #tpu.memory_space<vmem>>, %arg10: memref<1x128xf32, #tpu.memory_space<vmem>>, %arg11: memref<128x128xf32, #tpu.memory_space<vmem>>, %arg12: memref<1x128xf32, #tpu.memory_space<vmem>>, %arg13: memref<1x16x128xf32, #tpu.memory_space<vmem>>) attributes {dimension_semantics = [#tpu.dimension_semantics<parallel>, #tpu.dimension_semantics<parallel>], iteration_bounds = array<i64: 2, 1>, scalar_prefetch = 0 : i64, scratch_operands = 0 : i64, tpu.core_type = #tpu.core_type<tc>, window_params = [{transform_indices = @transform_0, window_bounds = array<i64: 1, 1, 18, 128>}, {pipeline_mode = #tpu.pipeline_mode<synchronous>, transform_indices = @transform_1, window_bounds = array<i64: 1, 128>}, {pipeline_mode = #tpu.pipeline_mode<synchronous>, transform_indices = @transform_2, window_bounds = array<i64: 1, 128>}, {pipeline_mode = #tpu.pipeline_mode<synchronous>, transform_indices = @transform_3, window_bounds = array<i64: 128, 256>}, {pipeline_mode = #tpu.pipeline_mode<synchronous>, transform_indices = @transform_4, window_bounds = array<i64: 1, 256>}, {pipeline_mode = #tpu.pipeline_mode<synchronous>, transform_indices = @transform_5, window_bounds = array<i64: 3, 1, 128>}, {pipeline_mode = #tpu.pipeline_mode<synchronous>, transform_indices = @transform_6, window_bounds = array<i64: 1, 128>}, {pipeline_mode = #tpu.pipeline_mode<synchronous>, transform_indices = @transform_7, window_bounds = array<i64: 128, 128>}, {pipeline_mode = #tpu.pipeline_mode<synchronous>, transform_indices = @transform_8, window_bounds = array<i64: 1, 128>}, {pipeline_mode = #tpu.pipeline_mode<synchronous>, transform_indices = @transform_9, window_bounds = array<i64: 128, 128>}, {pipeline_mode = #tpu.pipeline_mode<synchronous>, transform_indices = @transform_10, window_bounds = array<i64: 1, 128>}, {transform_indices = @transform_11, window_bounds = array<i64: 1, 16, 128>}]} {
    %c0 = arith.constant 0 : index
    %c0_0 = arith.constant 0 : index
    %c0_1 = arith.constant 0 : index
    %c0_2 = arith.constant 0 : index
    %0 = vector.load %arg2[%c0, %c0_0, %c0_1, %c0_2] : memref<1x1x18x128xf32, #tpu.memory_space<vmem>>, vector<1x1x18x128xf32>
    %1 = vector.shape_cast %0 : vector<1x1x18x128xf32> to vector<18x128xf32>
    %cst = arith.constant dense<0.000000e+00> : vector<18xf32>
    %2 = vector.multi_reduction <add>, %1, %cst [1] : vector<18x128xf32> to vector<18xf32>
    %3 = vector.shape_cast %2 : vector<18xf32> to vector<18x1xf32>
    %cst_3 = arith.constant 1.250000e-01 : f32
    %4 = vector.broadcast %cst_3 : f32 to vector<18x1xf32>
    %5 = arith.mulf %3, %4 : vector<18x1xf32>
    %6 = tpu.iota {dimensions = array<i32: 1>} : vector<1x128xi32>
    %c8_i32 = arith.constant 8 : i32
    %7 = vector.broadcast %c8_i32 : i32 to vector<1x128xi32>
    %8 = arith.cmpi slt, %6, %7 : vector<1x128xi32>
    %cst_4 = arith.constant 0.000000e+00 : f32
    %9 = vector.shape_cast %8 : vector<1x128xi1> to vector<1x128xi1>
    %10 = vector.broadcast %9 : vector<1x128xi1> to vector<18x128xi1>
    %11 = vector.shape_cast %5 : vector<18x1xf32> to vector<18x1xf32>
    %12 = vector.broadcast %11 : vector<18x1xf32> to vector<18x128xf32>
    %13 = vector.broadcast %cst_4 : f32 to vector<18x128xf32>
    %14 = arith.select %10, %12, %13 : vector<18x128xi1>, vector<18x128xf32>
    %15 = arith.subf %1, %14 : vector<18x128xf32>
    %16 = arith.mulf %15, %15 : vector<18x128xf32>
    %cst_5 = arith.constant dense<0.000000e+00> : vector<18xf32>
    %17 = vector.multi_reduction <add>, %16, %cst_5 [1] : vector<18x128xf32> to vector<18xf32>
    %18 = vector.shape_cast %17 : vector<18xf32> to vector<18x1xf32>
    %cst_6 = arith.constant 1.250000e-01 : f32
    %19 = vector.broadcast %cst_6 : f32 to vector<18x1xf32>
    %20 = arith.mulf %18, %19 : vector<18x1xf32>
    %cst_7 = arith.constant 9.99999974E-6 : f32
    %21 = vector.broadcast %cst_7 : f32 to vector<18x1xf32>
    %22 = arith.addf %20, %21 : vector<18x1xf32>
    %23 = math.rsqrt %22 : vector<18x1xf32>
    %24 = vector.broadcast %23 : vector<18x1xf32> to vector<18x128xf32>
    %25 = arith.mulf %15, %24 : vector<18x128xf32>
    %c0_8 = arith.constant 0 : index
    %c0_9 = arith.constant 0 : index
    %26 = vector.load %arg3[%c0_8, %c0_9] : memref<1x128xf32, #tpu.memory_space<vmem>>, vector<1x128xf32>
    %27 = vector.broadcast %26 : vector<1x128xf32> to vector<18x128xf32>
    %28 = arith.mulf %25, %27 : vector<18x128xf32>
    %c0_10 = arith.constant 0 : index
    %c0_11 = arith.constant 0 : index
    %29 = vector.load %arg4[%c0_10, %c0_11] : memref<1x128xf32, #tpu.memory_space<vmem>>, vector<1x128xf32>
    %30 = vector.broadcast %29 : vector<1x128xf32> to vector<18x128xf32>
    %31 = arith.addf %28, %30 : vector<18x128xf32>
    %c0_12 = arith.constant 0 : index
    %c0_13 = arith.constant 0 : index
    %32 = vector.load %arg5[%c0_12, %c0_13] : memref<128x256xf32, #tpu.memory_space<vmem>>, vector<128x256xf32>
    %cst_14 = arith.constant dense<0.000000e+00> : vector<18x256xf32>
    %33 = tpu.matmul %31, %32, %cst_14 {dimension_numbers = #tpu.dot_dimension_numbers<[1], [0], [0], [1], [0, 0, 1, 1], [], []>} : vector<18x128xf32>, vector<128x256xf32>, vector<18x256xf32> -> vector<18x256xf32>
    %c0_15 = arith.constant 0 : index
    %c0_16 = arith.constant 0 : index
    %34 = vector.load %arg6[%c0_15, %c0_16] : memref<1x256xf32, #tpu.memory_space<vmem>>, vector<1x256xf32>
    %35 = vector.broadcast %34 : vector<1x256xf32> to vector<18x256xf32>
    %36 = arith.addf %33, %35 : vector<18x256xf32>
    %37 = vector.extract_strided_slice %36 {offsets = [0, 0], sizes = [18, 128], strides = [1, 1]} : vector<18x256xf32> to vector<18x128xf32>
    %38 = vector.extract_strided_slice %36 {offsets = [0, 128], sizes = [18, 128], strides = [1, 1]} : vector<18x256xf32> to vector<18x128xf32>
    %cst_17 = arith.constant 5.000000e-01 : f32
    %39 = vector.broadcast %cst_17 : f32 to vector<18x128xf32>
    %40 = arith.mulf %39, %38 : vector<18x128xf32>
    %41 = math.tanh %40 : vector<18x128xf32>
    %cst_18 = arith.constant 5.000000e-01 : f32
    %42 = vector.broadcast %cst_18 : f32 to vector<18x128xf32>
    %43 = arith.mulf %42, %41 : vector<18x128xf32>
    %cst_19 = arith.constant 5.000000e-01 : f32
    %44 = vector.broadcast %cst_19 : f32 to vector<18x128xf32>
    %45 = arith.addf %43, %44 : vector<18x128xf32>
    %46 = arith.mulf %37, %45 : vector<18x128xf32>
    %47 = tpu.iota {dimensions = array<i32: 0>} : vector<18x1xi32>
    %c16_i32 = arith.constant 16 : i32
    %48 = arith.muli %arg1, %c16_i32 : i32
    %49 = vector.broadcast %48 : i32 to vector<18x1xi32>
    %50 = arith.addi %49, %47 : vector<18x1xi32>
    %c1_i32 = arith.constant 1 : i32
    %51 = vector.broadcast %c1_i32 : i32 to vector<18x1xi32>
    %52 = arith.subi %50, %51 : vector<18x1xi32>
    %c0_i32 = arith.constant 0 : i32
    %53 = vector.broadcast %c0_i32 : i32 to vector<18x1xi32>
    %54 = arith.cmpi sge, %52, %53 : vector<18x1xi32>
    %c16_i32_20 = arith.constant 16 : i32
    %55 = vector.broadcast %c16_i32_20 : i32 to vector<18x1xi32>
    %56 = arith.cmpi slt, %52, %55 : vector<18x1xi32>
    %57 = arith.andi %54, %56 : vector<18x1xi1>
    %cst_21 = arith.constant 0.000000e+00 : f32
    %58 = vector.shape_cast %57 : vector<18x1xi1> to vector<18x1xi1>
    %59 = vector.broadcast %58 : vector<18x1xi1> to vector<18x128xi1>
    %60 = vector.broadcast %cst_21 : f32 to vector<18x128xf32>
    %61 = arith.select %59, %46, %60 : vector<18x128xi1>, vector<18x128xf32>
    %62 = vector.extract_strided_slice %61 {offsets = [0, 0], sizes = [16, 128], strides = [1, 1]} : vector<18x128xf32> to vector<16x128xf32>
    %c0_22 = arith.constant 0 : index
    %c0_23 = arith.constant 0 : index
    %c0_24 = arith.constant 0 : index
    %63 = vector.load %arg7[%c0_22, %c0_23, %c0_24] : memref<3x1x128xf32, #tpu.memory_space<vmem>>, vector<1x1x128xf32>
    %64 = vector.shape_cast %63 : vector<1x1x128xf32> to vector<1x128xf32>
    %65 = vector.broadcast %64 : vector<1x128xf32> to vector<16x128xf32>
    %66 = arith.mulf %62, %65 : vector<16x128xf32>
    %67 = vector.extract_strided_slice %61 {offsets = [1, 0], sizes = [16, 128], strides = [1, 1]} : vector<18x128xf32> to vector<16x128xf32>
    %c1 = arith.constant 1 : index
    %c0_25 = arith.constant 0 : index
    %c0_26 = arith.constant 0 : index
    %68 = vector.load %arg7[%c1, %c0_25, %c0_26] : memref<3x1x128xf32, #tpu.memory_space<vmem>>, vector<1x1x128xf32>
    %69 = vector.shape_cast %68 : vector<1x1x128xf32> to vector<1x128xf32>
    %70 = vector.broadcast %69 : vector<1x128xf32> to vector<16x128xf32>
    %71 = arith.mulf %67, %70 : vector<16x128xf32>
    %72 = arith.addf %66, %71 : vector<16x128xf32>
    %73 = vector.extract_strided_slice %61 {offsets = [2, 0], sizes = [16, 128], strides = [1, 1]} : vector<18x128xf32> to vector<16x128xf32>
    %c2 = arith.constant 2 : index
    %c0_27 = arith.constant 0 : index
    %c0_28 = arith.constant 0 : index
    %74 = vector.load %arg7[%c2, %c0_27, %c0_28] : memref<3x1x128xf32, #tpu.memory_space<vmem>>, vector<1x1x128xf32>
    %75 = vector.shape_cast %74 : vector<1x1x128xf32> to vector<1x128xf32>
    %76 = vector.broadcast %75 : vector<1x128xf32> to vector<16x128xf32>
    %77 = arith.mulf %73, %76 : vector<16x128xf32>
    %78 = arith.addf %72, %77 : vector<16x128xf32>
    %c0_29 = arith.constant 0 : index
    %c0_30 = arith.constant 0 : index
    %79 = vector.load %arg8[%c0_29, %c0_30] : memref<1x128xf32, #tpu.memory_space<vmem>>, vector<1x128xf32>
    %80 = vector.broadcast %79 : vector<1x128xf32> to vector<16x128xf32>
    %81 = arith.addf %78, %80 : vector<16x128xf32>
    %c0_31 = arith.constant 0 : index
    %c0_32 = arith.constant 0 : index
    %82 = vector.load %arg9[%c0_31, %c0_32] : memref<128x128xf32, #tpu.memory_space<vmem>>, vector<128x128xf32>
    %cst_33 = arith.constant dense<0.000000e+00> : vector<16x128xf32>
    %83 = tpu.matmul %81, %82, %cst_33 {dimension_numbers = #tpu.dot_dimension_numbers<[1], [0], [0], [1], [0, 0, 1, 1], [], []>} : vector<16x128xf32>, vector<128x128xf32>, vector<16x128xf32> -> vector<16x128xf32>
    %c0_34 = arith.constant 0 : index
    %c0_35 = arith.constant 0 : index
    %84 = vector.load %arg10[%c0_34, %c0_35] : memref<1x128xf32, #tpu.memory_space<vmem>>, vector<1x128xf32>
    %85 = vector.broadcast %84 : vector<1x128xf32> to vector<16x128xf32>
    %86 = arith.addf %83, %85 : vector<16x128xf32>
    %cst_36 = arith.constant 5.000000e-01 : f32
    %87 = vector.broadcast %cst_36 : f32 to vector<16x128xf32>
    %88 = arith.mulf %87, %86 : vector<16x128xf32>
    %cst_37 = arith.constant 0.707106769 : f32
    %89 = vector.broadcast %cst_37 : f32 to vector<16x128xf32>
    %90 = arith.mulf %86, %89 : vector<16x128xf32>
    %91 = math.absf %90 : vector<16x128xf32>
    %cst_38 = arith.constant 0.327591091 : f32
    %92 = vector.broadcast %cst_38 : f32 to vector<16x128xf32>
    %93 = arith.mulf %92, %91 : vector<16x128xf32>
    %cst_39 = arith.constant 1.000000e+00 : f32
    %94 = vector.broadcast %cst_39 : f32 to vector<16x128xf32>
    %95 = arith.addf %94, %93 : vector<16x128xf32>
    %96 = tpu.reciprocal %95 : vector<16x128xf32> -> vector<16x128xf32>
    %cst_40 = arith.constant 1.06140542 : f32
    %97 = vector.broadcast %cst_40 : f32 to vector<16x128xf32>
    %98 = arith.mulf %97, %96 : vector<16x128xf32>
    %cst_41 = arith.constant -1.45315206 : f32
    %99 = vector.broadcast %cst_41 : f32 to vector<16x128xf32>
    %100 = arith.addf %98, %99 : vector<16x128xf32>
    %101 = arith.mulf %100, %96 : vector<16x128xf32>
    %cst_42 = arith.constant 1.42141378 : f32
    %102 = vector.broadcast %cst_42 : f32 to vector<16x128xf32>
    %103 = arith.addf %101, %102 : vector<16x128xf32>
    %104 = arith.mulf %103, %96 : vector<16x128xf32>
    %cst_43 = arith.constant -0.284496725 : f32
    %105 = vector.broadcast %cst_43 : f32 to vector<16x128xf32>
    %106 = arith.addf %104, %105 : vector<16x128xf32>
    %107 = arith.mulf %106, %96 : vector<16x128xf32>
    %cst_44 = arith.constant 0.254829586 : f32
    %108 = vector.broadcast %cst_44 : f32 to vector<16x128xf32>
    %109 = arith.addf %107, %108 : vector<16x128xf32>
    %110 = arith.mulf %109, %96 : vector<16x128xf32>
    %cst_45 = arith.constant 0.000000e+00 : f32
    %111 = vector.broadcast %cst_45 : f32 to vector<16x128xf32>
    %112 = arith.subf %111, %91 : vector<16x128xf32>
    %113 = arith.mulf %112, %91 : vector<16x128xf32>
    %114 = math.exp %113 : vector<16x128xf32>
    %115 = arith.mulf %110, %114 : vector<16x128xf32>
    %cst_46 = arith.constant 1.000000e+00 : f32
    %116 = vector.broadcast %cst_46 : f32 to vector<16x128xf32>
    %117 = arith.subf %116, %115 : vector<16x128xf32>
    %cst_47 = arith.constant 0.000000e+00 : f32
    %118 = vector.broadcast %cst_47 : f32 to vector<16x128xf32>
    %119 = arith.cmpf oge, %90, %118 : vector<16x128xf32>
    %cst_48 = arith.constant 0.000000e+00 : f32
    %120 = vector.broadcast %cst_48 : f32 to vector<16x128xf32>
    %121 = arith.subf %120, %117 : vector<16x128xf32>
    %122 = arith.select %119, %117, %121 : vector<16x128xi1>, vector<16x128xf32>
    %cst_49 = arith.constant 1.000000e+00 : f32
    %123 = vector.broadcast %cst_49 : f32 to vector<16x128xf32>
    %124 = arith.addf %123, %122 : vector<16x128xf32>
    %125 = arith.mulf %88, %124 : vector<16x128xf32>
    %c0_50 = arith.constant 0 : index
    %c0_51 = arith.constant 0 : index
    %126 = vector.load %arg11[%c0_50, %c0_51] : memref<128x128xf32, #tpu.memory_space<vmem>>, vector<128x128xf32>
    %cst_52 = arith.constant dense<0.000000e+00> : vector<16x128xf32>
    %127 = tpu.matmul %125, %126, %cst_52 {dimension_numbers = #tpu.dot_dimension_numbers<[1], [0], [0], [1], [0, 0, 1, 1], [], []>} : vector<16x128xf32>, vector<128x128xf32>, vector<16x128xf32> -> vector<16x128xf32>
    %c0_53 = arith.constant 0 : index
    %c0_54 = arith.constant 0 : index
    %128 = vector.load %arg12[%c0_53, %c0_54] : memref<1x128xf32, #tpu.memory_space<vmem>>, vector<1x128xf32>
    %129 = vector.broadcast %128 : vector<1x128xf32> to vector<16x128xf32>
    %130 = arith.addf %127, %129 : vector<16x128xf32>
    %c0_55 = arith.constant 0 : index
    %c0_56 = arith.constant 0 : index
    %c0_57 = arith.constant 0 : index
    %c0_58 = arith.constant 0 : index
    %131 = vector.load %arg2[%c0_55, %c0_56, %c0_57, %c0_58] : memref<1x1x18x128xf32, #tpu.memory_space<vmem>>, vector<1x1x18x128xf32>
    %132 = vector.shape_cast %131 : vector<1x1x18x128xf32> to vector<18x128xf32>
    %133 = vector.extract_strided_slice %132 {offsets = [1, 0], sizes = [16, 128], strides = [1, 1]} : vector<18x128xf32> to vector<16x128xf32>
    %134 = arith.addf %133, %130 : vector<16x128xf32>
    %c0_59 = arith.constant 0 : index
    %c0_60 = arith.constant 0 : index
    %c0_61 = arith.constant 0 : index
    %135 = vector.load %arg13[%c0_59, %c0_60, %c0_61] : memref<1x16x128xf32, #tpu.memory_space<vmem>>, vector<1x16x128xf32>
    %136 = vector.shape_cast %135 : vector<1x16x128xf32> to vector<16x128xf32>
    %137 = vector.shape_cast %134 : vector<16x128xf32> to vector<1x16x128xf32>
    tpu.vector_store %arg13[%c0_59, %c0_60, %c0_61], %137 {strides = array<i32>} : memref<1x16x128xf32, #tpu.memory_space<vmem>>, vector<1x16x128xf32>,
    return
  }
  func.func @transform_0(%arg0: i32, %arg1: i32) -> (i32, i32, i32, i32) {
    %c0_i32 = arith.constant 0 : i32
    %c0_i32_0 = arith.constant 0 : i32
    %c0_i32_1 = arith.constant 0 : i32
    return %arg0, %arg1, %c0_i32, %c0_i32_0 : i32, i32, i32, i32
  }
  func.func @transform_1(%arg0: i32, %arg1: i32) -> (i32, i32) {
    %c0_i32 = arith.constant 0 : i32
    %c0_i32_0 = arith.constant 0 : i32
    %c0_i32_1 = arith.constant 0 : i32
    return %c0_i32, %c0_i32_0 : i32, i32
  }
  func.func @transform_2(%arg0: i32, %arg1: i32) -> (i32, i32) {
    %c0_i32 = arith.constant 0 : i32
    %c0_i32_0 = arith.constant 0 : i32
    %c0_i32_1 = arith.constant 0 : i32
    return %c0_i32, %c0_i32_0 : i32, i32
  }
  func.func @transform_3(%arg0: i32, %arg1: i32) -> (i32, i32) {
    %c0_i32 = arith.constant 0 : i32
    %c0_i32_0 = arith.constant 0 : i32
    %c0_i32_1 = arith.constant 0 : i32
    return %c0_i32, %c0_i32_0 : i32, i32
  }
  func.func @transform_4(%arg0: i32, %arg1: i32) -> (i32, i32) {
    %c0_i32 = arith.constant 0 : i32
    %c0_i32_0 = arith.constant 0 : i32
    %c0_i32_1 = arith.constant 0 : i32
    return %c0_i32, %c0_i32_0 : i32, i32
  }
  func.func @transform_5(%arg0: i32, %arg1: i32) -> (i32, i32, i32) {
    %c0_i32 = arith.constant 0 : i32
    %c0_i32_0 = arith.constant 0 : i32
    %c0_i32_1 = arith.constant 0 : i32
    %c0_i32_2 = arith.constant 0 : i32
    return %c0_i32, %c0_i32_0, %c0_i32_1 : i32, i32, i32
  }
  func.func @transform_6(%arg0: i32, %arg1: i32) -> (i32, i32) {
    %c0_i32 = arith.constant 0 : i32
    %c0_i32_0 = arith.constant 0 : i32
    %c0_i32_1 = arith.constant 0 : i32
    return %c0_i32, %c0_i32_0 : i32, i32
  }
  func.func @transform_7(%arg0: i32, %arg1: i32) -> (i32, i32) {
    %c0_i32 = arith.constant 0 : i32
    %c0_i32_0 = arith.constant 0 : i32
    %c0_i32_1 = arith.constant 0 : i32
    return %c0_i32, %c0_i32_0 : i32, i32
  }
  func.func @transform_8(%arg0: i32, %arg1: i32) -> (i32, i32) {
    %c0_i32 = arith.constant 0 : i32
    %c0_i32_0 = arith.constant 0 : i32
    %c0_i32_1 = arith.constant 0 : i32
    return %c0_i32, %c0_i32_0 : i32, i32
  }
  func.func @transform_9(%arg0: i32, %arg1: i32) -> (i32, i32) {
    %c0_i32 = arith.constant 0 : i32
    %c0_i32_0 = arith.constant 0 : i32
    %c0_i32_1 = arith.constant 0 : i32
    return %c0_i32, %c0_i32_0 : i32, i32
  }
  func.func @transform_10(%arg0: i32, %arg1: i32) -> (i32, i32) {
    %c0_i32 = arith.constant 0 : i32
    %c0_i32_0 = arith.constant 0 : i32
    %c0_i32_1 = arith.constant 0 : i32
    return %c0_i32, %c0_i32_0 : i32, i32
  }
  func.func @transform_11(%arg0: i32, %arg1: i32) -> (i32, i32, i32) {
    %c0_i32 = arith.constant 0 : i32
    %c0_i32_0 = arith.constant 0 : i32
    return %arg0, %arg1, %c0_i32 : i32, i32, i32
  }
}

module attributes {stable_mosaic.version = 11 : i64} {
  func.func @_cla_kernel(%arg0: i32, %arg1: i32, %arg2: memref<1x1x18x128xf32, #tpu.memory_space<vmem>>, %arg3: memref<1x128xf32, #tpu.memory_space<vmem>>, %arg4: memref<1x128xf32, #tpu.memory_space<vmem>>, %arg5: memref<128x256xf32, #tpu.memory_space<vmem>>, %arg6: memref<1x256xf32, #tpu.memory_space<vmem>>, %arg7: memref<3x1x128xf32, #tpu.memory_space<vmem>>, %arg8: memref<1x128xf32, #tpu.memory_space<vmem>>, %arg9: memref<128x128xf32, #tpu.memory_space<vmem>>, %arg10: memref<1x128xf32, #tpu.memory_space<vmem>>, %arg11: memref<128x128xf32, #tpu.memory_space<vmem>>, %arg12: memref<1x128xf32, #tpu.memory_space<vmem>>, %arg13: memref<1x16x128xf32, #tpu.memory_space<vmem>>) attributes {dimension_semantics = [#tpu.dimension_semantics<parallel>, #tpu.dimension_semantics<parallel>], iteration_bounds = array<i64: 2, 1>, scalar_prefetch = 0 : i64, scratch_operands = 0 : i64, tpu.core_type = #tpu.core_type<tc>, window_params = [{transform_indices = @transform_0, window_bounds = array<i64: 1, 1, 18, 128>}, {pipeline_mode = #tpu.pipeline_mode<synchronous>, transform_indices = @transform_1, window_bounds = array<i64: 1, 128>}, {pipeline_mode = #tpu.pipeline_mode<synchronous>, transform_indices = @transform_2, window_bounds = array<i64: 1, 128>}, {pipeline_mode = #tpu.pipeline_mode<synchronous>, transform_indices = @transform_3, window_bounds = array<i64: 128, 256>}, {pipeline_mode = #tpu.pipeline_mode<synchronous>, transform_indices = @transform_4, window_bounds = array<i64: 1, 256>}, {pipeline_mode = #tpu.pipeline_mode<synchronous>, transform_indices = @transform_5, window_bounds = array<i64: 3, 1, 128>}, {pipeline_mode = #tpu.pipeline_mode<synchronous>, transform_indices = @transform_6, window_bounds = array<i64: 1, 128>}, {pipeline_mode = #tpu.pipeline_mode<synchronous>, transform_indices = @transform_7, window_bounds = array<i64: 128, 128>}, {pipeline_mode = #tpu.pipeline_mode<synchronous>, transform_indices = @transform_8, window_bounds = array<i64: 1, 128>}, {pipeline_mode = #tpu.pipeline_mode<synchronous>, transform_indices = @transform_9, window_bounds = array<i64: 128, 128>}, {pipeline_mode = #tpu.pipeline_mode<synchronous>, transform_indices = @transform_10, window_bounds = array<i64: 1, 128>}, {transform_indices = @transform_11, window_bounds = array<i64: 1, 16, 128>}]} {
    %c0 = arith.constant 0 : index
    %c0_0 = arith.constant 0 : index
    %c0_1 = arith.constant 0 : index
    %c0_2 = arith.constant 0 : index
    %0 = vector.load %arg2[%c0, %c0_0, %c0_1, %c0_2] : memref<1x1x18x128xf32, #tpu.memory_space<vmem>>, vector<1x1x18x128xf32>
    %1 = vector.shape_cast %0 : vector<1x1x18x128xf32> to vector<18x128xf32>
    %cst = arith.constant dense<0.000000e+00> : vector<18xf32>
    %2 = vector.multi_reduction <add>, %1, %cst [1] : vector<18x128xf32> to vector<18xf32>
    %3 = vector.shape_cast %2 : vector<18xf32> to vector<18x1xf32>
    %cst_3 = arith.constant 1.250000e-01 : f32
    %4 = vector.broadcast %cst_3 : f32 to vector<18x1xf32>
    %5 = arith.mulf %3, %4 : vector<18x1xf32>
    %6 = tpu.iota {dimensions = array<i32: 1>} : vector<1x128xi32>
    %c8_i32 = arith.constant 8 : i32
    %7 = vector.broadcast %c8_i32 : i32 to vector<1x128xi32>
    %8 = arith.cmpi slt, %6, %7 : vector<1x128xi32>
    %cst_4 = arith.constant 0.000000e+00 : f32
    %9 = vector.shape_cast %8 : vector<1x128xi1> to vector<1x128xi1>
    %10 = vector.broadcast %9 : vector<1x128xi1> to vector<18x128xi1>
    %11 = vector.shape_cast %5 : vector<18x1xf32> to vector<18x1xf32>
    %12 = vector.broadcast %11 : vector<18x1xf32> to vector<18x128xf32>
    %13 = vector.broadcast %cst_4 : f32 to vector<18x128xf32>
    %14 = arith.select %10, %12, %13 : vector<18x128xi1>, vector<18x128xf32>
    %15 = arith.subf %1, %14 : vector<18x128xf32>
    %16 = arith.mulf %15, %15 : vector<18x128xf32>
    %cst_5 = arith.constant dense<0.000000e+00> : vector<18xf32>
    %17 = vector.multi_reduction <add>, %16, %cst_5 [1] : vector<18x128xf32> to vector<18xf32>
    %18 = vector.shape_cast %17 : vector<18xf32> to vector<18x1xf32>
    %cst_6 = arith.constant 1.250000e-01 : f32
    %19 = vector.broadcast %cst_6 : f32 to vector<18x1xf32>
    %20 = arith.mulf %18, %19 : vector<18x1xf32>
    %cst_7 = arith.constant 9.99999974E-6 : f32
    %21 = vector.broadcast %cst_7 : f32 to vector<18x1xf32>
    %22 = arith.addf %20, %21 : vector<18x1xf32>
    %23 = math.rsqrt %22 : vector<18x1xf32>
    %24 = vector.broadcast %23 : vector<18x1xf32> to vector<18x128xf32>
    %25 = arith.mulf %15, %24 : vector<18x128xf32>
    %c0_8 = arith.constant 0 : index
    %c0_9 = arith.constant 0 : index
    %26 = vector.load %arg3[%c0_8, %c0_9] : memref<1x128xf32, #tpu.memory_space<vmem>>, vector<1x128xf32>
    %27 = vector.broadcast %26 : vector<1x128xf32> to vector<18x128xf32>
    %28 = arith.mulf %25, %27 : vector<18x128xf32>
    %c0_10 = arith.constant 0 : index
    %c0_11 = arith.constant 0 : index
    %29 = vector.load %arg4[%c0_10, %c0_11] : memref<1x128xf32, #tpu.memory_space<vmem>>, vector<1x128xf32>
    %30 = vector.broadcast %29 : vector<1x128xf32> to vector<18x128xf32>
    %31 = arith.addf %28, %30 : vector<18x128xf32>
    %c0_12 = arith.constant 0 : index
    %c0_13 = arith.constant 0 : index
    %32 = vector.load %arg5[%c0_12, %c0_13] : memref<128x256xf32, #tpu.memory_space<vmem>>, vector<128x256xf32>
    %cst_14 = arith.constant dense<0.000000e+00> : vector<18x256xf32>
    %33 = tpu.matmul %31, %32, %cst_14 {dimension_numbers = #tpu.dot_dimension_numbers<[1], [0], [0], [1], [0, 0, 1, 1], [], []>} : vector<18x128xf32>, vector<128x256xf32>, vector<18x256xf32> -> vector<18x256xf32>
    %c0_15 = arith.constant 0 : index
    %c0_16 = arith.constant 0 : index
    %34 = vector.load %arg6[%c0_15, %c0_16] : memref<1x256xf32, #tpu.memory_space<vmem>>, vector<1x256xf32>
    %35 = vector.broadcast %34 : vector<1x256xf32> to vector<18x256xf32>
    %36 = arith.addf %33, %35 : vector<18x256xf32>
    %37 = vector.extract_strided_slice %36 {offsets = [0, 0], sizes = [18, 128], strides = [1, 1]} : vector<18x256xf32> to vector<18x128xf32>
    %38 = vector.extract_strided_slice %36 {offsets = [0, 128], sizes = [18, 128], strides = [1, 1]} : vector<18x256xf32> to vector<18x128xf32>
    %cst_17 = arith.constant 5.000000e-01 : f32
    %39 = vector.broadcast %cst_17 : f32 to vector<18x128xf32>
    %40 = arith.mulf %39, %38 : vector<18x128xf32>
    %41 = math.tanh %40 : vector<18x128xf32>
    %cst_18 = arith.constant 5.000000e-01 : f32
    %42 = vector.broadcast %cst_18 : f32 to vector<18x128xf32>
    %43 = arith.mulf %42, %41 : vector<18x128xf32>
    %cst_19 = arith.constant 5.000000e-01 : f32
    %44 = vector.broadcast %cst_19 : f32 to vector<18x128xf32>
    %45 = arith.addf %43, %44 : vector<18x128xf32>
    %46 = arith.mulf %37, %45 : vector<18x128xf32>
    %47 = tpu.iota {dimensions = array<i32: 0>} : vector<18x1xi32>
    %c16_i32 = arith.constant 16 : i32
    %48 = arith.muli %arg1, %c16_i32 : i32
    %49 = vector.broadcast %48 : i32 to vector<18x1xi32>
    %50 = arith.addi %49, %47 : vector<18x1xi32>
    %c1_i32 = arith.constant 1 : i32
    %51 = vector.broadcast %c1_i32 : i32 to vector<18x1xi32>
    %52 = arith.subi %50, %51 : vector<18x1xi32>
    %c0_i32 = arith.constant 0 : i32
    %53 = vector.broadcast %c0_i32 : i32 to vector<18x1xi32>
    %54 = arith.cmpi sge, %52, %53 : vector<18x1xi32>
    %c16_i32_20 = arith.constant 16 : i32
    %55 = vector.broadcast %c16_i32_20 : i32 to vector<18x1xi32>
    %56 = arith.cmpi slt, %52, %55 : vector<18x1xi32>
    %57 = arith.andi %54, %56 : vector<18x1xi1>
    %cst_21 = arith.constant 0.000000e+00 : f32
    %58 = vector.shape_cast %57 : vector<18x1xi1> to vector<18x1xi1>
    %59 = vector.broadcast %58 : vector<18x1xi1> to vector<18x128xi1>
    %60 = vector.broadcast %cst_21 : f32 to vector<18x128xf32>
    %61 = arith.select %59, %46, %60 : vector<18x128xi1>, vector<18x128xf32>
    %62 = vector.extract_strided_slice %61 {offsets = [0, 0], sizes = [16, 128], strides = [1, 1]} : vector<18x128xf32> to vector<16x128xf32>
    %c0_22 = arith.constant 0 : index
    %c0_23 = arith.constant 0 : index
    %c0_24 = arith.constant 0 : index
    %63 = vector.load %arg7[%c0_22, %c0_23, %c0_24] : memref<3x1x128xf32, #tpu.memory_space<vmem>>, vector<1x1x128xf32>
    %64 = vector.shape_cast %63 : vector<1x1x128xf32> to vector<1x128xf32>
    %65 = vector.broadcast %64 : vector<1x128xf32> to vector<16x128xf32>
    %66 = arith.mulf %62, %65 : vector<16x128xf32>
    %67 = vector.extract_strided_slice %61 {offsets = [1, 0], sizes = [16, 128], strides = [1, 1]} : vector<18x128xf32> to vector<16x128xf32>
    %c1 = arith.constant 1 : index
    %c0_25 = arith.constant 0 : index
    %c0_26 = arith.constant 0 : index
    %68 = vector.load %arg7[%c1, %c0_25, %c0_26] : memref<3x1x128xf32, #tpu.memory_space<vmem>>, vector<1x1x128xf32>
    %69 = vector.shape_cast %68 : vector<1x1x128xf32> to vector<1x128xf32>
    %70 = vector.broadcast %69 : vector<1x128xf32> to vector<16x128xf32>
    %71 = arith.mulf %67, %70 : vector<16x128xf32>
    %72 = arith.addf %66, %71 : vector<16x128xf32>
    %73 = vector.extract_strided_slice %61 {offsets = [2, 0], sizes = [16, 128], strides = [1, 1]} : vector<18x128xf32> to vector<16x128xf32>
    %c2 = arith.constant 2 : index
    %c0_27 = arith.constant 0 : index
    %c0_28 = arith.constant 0 : index
    %74 = vector.load %arg7[%c2, %c0_27, %c0_28] : memref<3x1x128xf32, #tpu.memory_space<vmem>>, vector<1x1x128xf32>
    %75 = vector.shape_cast %74 : vector<1x1x128xf32> to vector<1x128xf32>
    %76 = vector.broadcast %75 : vector<1x128xf32> to vector<16x128xf32>
    %77 = arith.mulf %73, %76 : vector<16x128xf32>
    %78 = arith.addf %72, %77 : vector<16x128xf32>
    %c0_29 = arith.constant 0 : index
    %c0_30 = arith.constant 0 : index
    %79 = vector.load %arg8[%c0_29, %c0_30] : memref<1x128xf32, #tpu.memory_space<vmem>>, vector<1x128xf32>
    %80 = vector.broadcast %79 : vector<1x128xf32> to vector<16x128xf32>
    %81 = arith.addf %78, %80 : vector<16x128xf32>
    %c0_31 = arith.constant 0 : index
    %c0_32 = arith.constant 0 : index
    %82 = vector.load %arg9[%c0_31, %c0_32] : memref<128x128xf32, #tpu.memory_space<vmem>>, vector<128x128xf32>
    %cst_33 = arith.constant dense<0.000000e+00> : vector<16x128xf32>
    %83 = tpu.matmul %81, %82, %cst_33 {dimension_numbers = #tpu.dot_dimension_numbers<[1], [0], [0], [1], [0, 0, 1, 1], [], []>} : vector<16x128xf32>, vector<128x128xf32>, vector<16x128xf32> -> vector<16x128xf32>
    %c0_34 = arith.constant 0 : index
    %c0_35 = arith.constant 0 : index
    %84 = vector.load %arg10[%c0_34, %c0_35] : memref<1x128xf32, #tpu.memory_space<vmem>>, vector<1x128xf32>
    %85 = vector.broadcast %84 : vector<1x128xf32> to vector<16x128xf32>
    %86 = arith.addf %83, %85 : vector<16x128xf32>
    %cst_36 = arith.constant 5.000000e-01 : f32
    %87 = vector.broadcast %cst_36 : f32 to vector<16x128xf32>
    %88 = arith.mulf %87, %86 : vector<16x128xf32>
    %cst_37 = arith.constant 0.707106769 : f32
    %89 = vector.broadcast %cst_37 : f32 to vector<16x128xf32>
    %90 = arith.mulf %86, %89 : vector<16x128xf32>
    %91 = math.absf %90 : vector<16x128xf32>
    %cst_38 = arith.constant 0.327591091 : f32
    %92 = vector.broadcast %cst_38 : f32 to vector<16x128xf32>
    %93 = arith.mulf %92, %91 : vector<16x128xf32>
    %cst_39 = arith.constant 1.000000e+00 : f32
    %94 = vector.broadcast %cst_39 : f32 to vector<16x128xf32>
    %95 = arith.addf %94, %93 : vector<16x128xf32>
    %96 = tpu.reciprocal %95 : vector<16x128xf32> -> vector<16x128xf32>
    %cst_40 = arith.constant 1.06140542 : f32
    %97 = vector.broadcast %cst_40 : f32 to vector<16x128xf32>
    %98 = arith.mulf %97, %96 : vector<16x128xf32>
    %cst_41 = arith.constant -1.45315206 : f32
    %99 = vector.broadcast %cst_41 : f32 to vector<16x128xf32>
    %100 = arith.addf %98, %99 : vector<16x128xf32>
    %101 = arith.mulf %100, %96 : vector<16x128xf32>
    %cst_42 = arith.constant 1.42141378 : f32
    %102 = vector.broadcast %cst_42 : f32 to vector<16x128xf32>
    %103 = arith.addf %101, %102 : vector<16x128xf32>
    %104 = arith.mulf %103, %96 : vector<16x128xf32>
    %cst_43 = arith.constant -0.284496725 : f32
    %105 = vector.broadcast %cst_43 : f32 to vector<16x128xf32>
    %106 = arith.addf %104, %105 : vector<16x128xf32>
    %107 = arith.mulf %106, %96 : vector<16x128xf32>
    %cst_44 = arith.constant 0.254829586 : f32
    %108 = vector.broadcast %cst_44 : f32 to vector<16x128xf32>
    %109 = arith.addf %107, %108 : vector<16x128xf32>
    %110 = arith.mulf %109, %96 : vector<16x128xf32>
    %cst_45 = arith.constant 0.000000e+00 : f32
    %111 = vector.broadcast %cst_45 : f32 to vector<16x128xf32>
    %112 = arith.subf %111, %91 : vector<16x128xf32>
    %113 = arith.mulf %112, %91 : vector<16x128xf32>
    %114 = math.exp %113 : vector<16x128xf32>
    %115 = arith.mulf %110, %114 : vector<16x128xf32>
    %cst_46 = arith.constant 1.000000e+00 : f32
    %116 = vector.broadcast %cst_46 : f32 to vector<16x128xf32>
    %117 = arith.subf %116, %115 : vector<16x128xf32>
    %cst_47 = arith.constant 0.000000e+00 : f32
    %118 = vector.broadcast %cst_47 : f32 to vector<16x128xf32>
    %119 = arith.cmpf oge, %90, %118 : vector<16x128xf32>
    %cst_48 = arith.constant 0.000000e+00 : f32
    %120 = vector.broadcast %cst_48 : f32 to vector<16x128xf32>
    %121 = arith.subf %120, %117 : vector<16x128xf32>
    %122 = arith.select %119, %117, %121 : vector<16x128xi1>, vector<16x128xf32>
    %cst_49 = arith.constant 1.000000e+00 : f32
    %123 = vector.broadcast %cst_49 : f32 to vector<16x128xf32>
    %124 = arith.addf %123, %122 : vector<16x128xf32>
    %125 = arith.mulf %88, %124 : vector<16x128xf32>
    %c0_50 = arith.constant 0 : index
    %c0_51 = arith.constant 0 : index
    %126 = vector.load %arg11[%c0_50, %c0_51] : memref<128x128xf32, #tpu.memory_space<vmem>>, vector<128x128xf32>
    %cst_52 = arith.constant dense<0.000000e+00> : vector<16x128xf32>
    %127 = tpu.matmul %125, %126, %cst_52 {dimension_numbers = #tpu.dot_dimension_numbers<[1], [0], [0], [1], [0, 0, 1, 1], [], []>} : vector<16x128xf32>, vector<128x128xf32>, vector<16x128xf32> -> vector<16x128xf32>
    %c0_53 = arith.constant 0 : index
    %c0_54 = arith.constant 0 : index
    %128 = vector.load %arg12[%c0_53, %c0_54] : memref<1x128xf32, #tpu.memory_space<vmem>>, vector<1x128xf32>
    %129 = vector.broadcast %128 : vector<1x128xf32> to vector<16x128xf32>
    %130 = arith.addf %127, %129 : vector<16x128xf32>
    %c0_55 = arith.constant 0 : index
    %c0_56 = arith.constant 0 : index
    %c0_57 = arith.constant 0 : index
    %c0_58 = arith.constant 0 : index
    %131 = vector.load %arg2[%c0_55, %c0_56, %c0_57, %c0_58] : memref<1x1x18x128xf32, #tpu.memory_space<vmem>>, vector<1x1x18x128xf32>
    %132 = vector.shape_cast %131 : vector<1x1x18x128xf32> to vector<18x128xf32>
    %133 = vector.extract_strided_slice %132 {offsets = [1, 0], sizes = [16, 128], strides = [1, 1]} : vector<18x128xf32> to vector<16x128xf32>
    %134 = arith.addf %133, %130 : vector<16x128xf32>
    %c0_59 = arith.constant 0 : index
    %c0_60 = arith.constant 0 : index
    %c0_61 = arith.constant 0 : index
    %135 = vector.load %arg13[%c0_59, %c0_60, %c0_61] : memref<1x16x128xf32, #tpu.memory_space<vmem>>, vector<1x16x128xf32>
    %136 = vector.shape_cast %135 : vector<1x16x128xf32> to vector<16x128xf32>
    %137 = vector.shape_cast %134 : vector<16x128xf32> to vector<1x16x128xf32>
    tpu.vector_store %arg13[%c0_59, %c0_60, %c0_61], %137 {strides = array<i32>} : memref<1x16x128xf32, #tpu.memory_space<vmem>>, vector<1x16x128xf32>,
    return
  }
  func.func @transform_0(%arg0: i32, %arg1: i32) -> (i32, i32, i32, i32) {
    %c0_i32 = arith.constant 0 : i32
    %c0_i32_0 = arith.constant 0 : i32
    %c0_i32_1 = arith.constant 0 : i32
    return %arg0, %arg1, %c0_i32, %c0_i32_0 : i32, i32, i32, i32
  }
  func.func @transform_1(%arg0: i32, %arg1: i32) -> (i32, i32) {
    %c0_i32 = arith.constant 0 : i32
    %c0_i32_0 = arith.constant 0 : i32
    %c0_i32_1 = arith.constant 0 : i32
    return %c0_i32, %c0_i32_0 : i32, i32
  }
  func.func @transform_2(%arg0: i32, %arg1: i32) -> (i32, i32) {
    %c0_i32 = arith.constant 0 : i32
    %c0_i32_0 = arith.constant 0 : i32
    %c0_i32_1 = arith.constant 0 : i32
    return %c0_i32, %c0_i32_0 : i32, i32
  }
  func.func @transform_3(%arg0: i32, %arg1: i32) -> (i32, i32) {
    %c0_i32 = arith.constant 0 : i32
    %c0_i32_0 = arith.constant 0 : i32
    %c0_i32_1 = arith.constant 0 : i32
    return %c0_i32, %c0_i32_0 : i32, i32
  }
  func.func @transform_4(%arg0: i32, %arg1: i32) -> (i32, i32) {
    %c0_i32 = arith.constant 0 : i32
    %c0_i32_0 = arith.constant 0 : i32
    %c0_i32_1 = arith.constant 0 : i32
    return %c0_i32, %c0_i32_0 : i32, i32
  }
  func.func @transform_5(%arg0: i32, %arg1: i32) -> (i32, i32, i32) {
    %c0_i32 = arith.constant 0 : i32
    %c0_i32_0 = arith.constant 0 : i32
    %c0_i32_1 = arith.constant 0 : i32
    %c0_i32_2 = arith.constant 0 : i32
    return %c0_i32, %c0_i32_0, %c0_i32_1 : i32, i32, i32
  }
  func.func @transform_6(%arg0: i32, %arg1: i32) -> (i32, i32) {
    %c0_i32 = arith.constant 0 : i32
    %c0_i32_0 = arith.constant 0 : i32
    %c0_i32_1 = arith.constant 0 : i32
    return %c0_i32, %c0_i32_0 : i32, i32
  }
  func.func @transform_7(%arg0: i32, %arg1: i32) -> (i32, i32) {
    %c0_i32 = arith.constant 0 : i32
    %c0_i32_0 = arith.constant 0 : i32
    %c0_i32_1 = arith.constant 0 : i32
    return %c0_i32, %c0_i32_0 : i32, i32
  }
  func.func @transform_8(%arg0: i32, %arg1: i32) -> (i32, i32) {
    %c0_i32 = arith.constant 0 : i32
    %c0_i32_0 = arith.constant 0 : i32
    %c0_i32_1 = arith.constant 0 : i32
    return %c0_i32, %c0_i32_0 : i32, i32
  }
  func.func @transform_9(%arg0: i32, %arg1: i32) -> (i32, i32) {
    %c0_i32 = arith.constant 0 : i32
    %c0_i32_0 = arith.constant 0 : i32
    %c0_i32_1 = arith.constant 0 : i32
    return %c0_i32, %c0_i32_0 : i32, i32
  }
  func.func @transform_10(%arg0: i32, %arg1: i32) -> (i32, i32) {
    %c0_i32 = arith.constant 0 : i32
    %c0_i32_0 = arith.constant 0 : i32
    %c0_i32_1 = arith.constant 0 : i32
    return %c0_i32, %c0_i32_0 : i32, i32
  }
  func.func @transform_11(%arg0: i32, %arg1: i32) -> (i32, i32, i32) {
    %c0_i32 = arith.constant 0 : i32
    %c0_i32_0 = arith.constant 0 : i32
    return %arg0, %arg1, %c0_i32 : i32, i32, i32
  }
}

</mosaic_0001>

<llo_original>
// kernel: tpu_custom_call.1
$region0: #{tpu_custom_call.1}
  #allocation0 [shape = 'u32[]', space=smem, size = 0x4, offset = 0x4, fixed_abs, tag = 'smem constant byte address 0x4 - core index']
  #allocation1 [shape = 'u32[144,128]{1,0:T(1,128)}', space=vmem, size = 0x12000, scoped, tag = 'internal scratch']
  %s0 = inlined_call_operand.vmem [shape: f32[2,1,18,128], index: 0, kind: input, shape index: {}]
  %s1 = inlined_call_operand.vmem [shape: f32[1,128], index: 1, kind: input, shape index: {}]
  %s2 = inlined_call_operand.vmem [shape: f32[1,128], index: 2, kind: input, shape index: {}]
  %s3 = inlined_call_operand.hbm [shape: f32[128,256], index: 3, kind: input, shape index: {}]
  %s4 = inlined_call_operand.vmem [shape: f32[1,256], index: 4, kind: input, shape index: {}]
  %s5 = inlined_call_operand.vmem [shape: f32[3,1,128], index: 5, kind: input, shape index: {}]
  %s6 = inlined_call_operand.vmem [shape: f32[1,128], index: 6, kind: input, shape index: {}]
  %s7 = inlined_call_operand.hbm [shape: f32[128,128], index: 7, kind: input, shape index: {}]
  %s8 = inlined_call_operand.vmem [shape: f32[1,128], index: 8, kind: input, shape index: {}]
  %s9 = inlined_call_operand.hbm [shape: f32[128,128], index: 9, kind: input, shape index: {}]
  %s10 = inlined_call_operand.vmem [shape: f32[1,128], index: 10, kind: input, shape index: {}]
  %s11 = inlined_call_operand.hbm [shape: f32[2,16,128], index: 11, kind: output, shape index: {}]
  %s12 = sld [smem:[#allocation0]]
  $region89: #{tpu_custom_call.1} parent=0
    _
  %s14 = ssub.s32 1, %s12
  %s15 = scalar_select 0, %s14, %s12
  $region1: #{tpu_custom_call.1} parent=0
    #allocation2 [shape = 'u8[131072]{0}', space=vmem, size = 0x20000, scoped, tag = 'input window, operand 3, single buffered']
    #allocation3 [shape = 's32[2]{0}', space=sflag, size = 0x8, scoped, tag = 'scoped memory for tpu_custom_call.1']
    #allocation4 [shape = 's32[2]{0}', space=sflag, size = 0x8, scoped, tag = 'scoped memory for tpu_custom_call.1']
    #allocation5 [shape = 'u8[65536]{0}', space=vmem, size = 0x10000, scoped, tag = 'input window, operand 7, single buffered']
    #allocation6 [shape = 's32[1]{0}', space=sflag, size = 0x4, scoped, tag = 'scoped memory for tpu_custom_call.1']
    #allocation7 [shape = 'u8[65536]{0}', space=vmem, size = 0x10000, scoped, tag = 'input window, operand 9, single buffered']
    #allocation8 [shape = 'u8[16384]{0}', space=vmem, size = 0x4000, scoped, tag = 'output window, operand 0']
    %16 = vsyncpa [#allocation3], 0
    %17 = vsyncpa [#allocation6], 0
    %18 = vsyncpa [#allocation4], 0
    %s19 = scalar_lea.sflag [#allocation4], 1
    %20 = vsyncpa %s19, 0
    loop: start=0, step=1, limit=4
    $region2: #{tpu_custom_call.1} parent=1 // loop_pre_header
      _
    $region3: #{tpu_custom_call.1} parent=1 // loop_header
      %s22 = sphi 0, %s26
      %p23 = scmp.ge.s32.totalorder %s22, 4
      %s29 = sphi 0, %s41
      %s30 = sphi 0, %s37
      %s31 = sphi 0, %s29
      %s32 = sphi 0, %s30
      %s33 = sphi 0, %s31
      %s34 = sphi 0, %s32
      %s46 = sphi 0, %s48
      %s49 = sphi 0, %s46
      %s50 = sphi 0, %s49
      %s66 = sphi 0, %s50
      %s70 = sphi 0, %s70
      %s72 = sphi 0, %s70
      %s73 = sphi 0, %s72
      %s87 = sphi 0, %s73
      %s91 = sphi 0, %s91
      %s93 = sphi 0, %s91
      %s94 = sphi 0, %s93
      %s108 = sphi 0, %s94
      %s112 = sphi 0, %s112
      %s114 = sphi 0, %s112
      %s115 = sphi 0, %s114
      %s129 = sphi 0, %s115
      %s133 = sphi 0, %s133
      %s135 = sphi 0, %s133
      %s136 = sphi 0, %s135
      %s150 = sphi 0, %s136
      %s154 = sphi 0, %s154
      %s156 = sphi 0, %s154
      %s157 = sphi 0, %s156
      %s171 = sphi 0, %s157
      %s175 = sphi 0, %s175
      %s177 = sphi 0, %s175
      %s178 = sphi 0, %s177
      %s192 = sphi 0, %s178
      %s196 = sphi 0, %s196
      %s198 = sphi 0, %s196
      %s199 = sphi 0, %s198
      %s213 = sphi 0, %s199
      %s217 = sphi 0, %s217
      %s219 = sphi 0, %s217
      %s220 = sphi 0, %s219
      %s234 = sphi 0, %s220
      %s238 = sphi 0, %s238
      %s240 = sphi 0, %s238
      %s241 = sphi 0, %s240
      %s255 = sphi 0, %s241
      %s259 = sphi 0, %s259
      %s261 = sphi 0, %s259
      %s262 = sphi 0, %s261
      %s276 = sphi 0, %s262
      %s284 = sphi 0, %s286
      %s287 = sphi 0, %s284
      %s288 = sphi 0, %s287
      %s304 = sphi 0, %s288
    $region4: #{tpu_custom_call.1} parent=1 // loop_header_branch
      %25 = sbr.rel (%p23) target = $region8
    $region5: #{tpu_custom_call.1} parent=1 // loop_body
      %s27 = ssub.s32 %s22, 1
      %s28 = ssub.s32 %s22, 2
      %s35 = sadd.s32 1, %s30
      %p36 = scmp.ge.s32.totalorder %s35, 1
      %s37 = scalar_select %p36, 0, %s35
      %s38 = sadd.s32 1, %s29
      %s39 = scalar_select %p36, %s38, %s29
      %p40 = scmp.ge.s32.totalorder %s39, 2
      %s41 = scalar_select %p40, 0, %s39
      %s42 = ssub.s32 %s29, %s41
      %s43 = ssub.s32 %s30, %s37
      %s44 = sor.u32 %s42, %s43
      %p45 = scmp.eq.s32.totalorder %s44, 0
      %s47 = sadd.s32 %s46, 1
      %s48 = scalar_select %p45, %s46, %s47
      %p51 = pneg %p45
      %p52 = scmp.eq.s32.totalorder %s22, 1
      %p53 = por %p51, %p52
      %p54 = scmp.ne.s32.totalorder %s46, %s49
      %p55 = scmp.eq.s32.totalorder %s22, 0
      %p56 = por %p54, %p55
      %p57 = scmp.ne.s32.totalorder %s46, %s49
      %p58 = scmp.eq.s32.totalorder %s27, 1
      %p59 = por %p57, %p58
      %p60 = scmp.ne.s32.totalorder %s49, %s50
      %p61 = scmp.eq.s32.totalorder %s27, 0
      %p62 = por %p60, %p61
      %p63 = scmp.ne.s32.totalorder %s49, %s50
      %p64 = scmp.eq.s32.totalorder %s28, 1
      %p65 = por %p63, %p64
      %p67 = scmp.ne.s32.totalorder %s50, %s66
      %p68 = scmp.eq.s32.totalorder %s28, 0
      %p69 = por %p67, %p68
      %s71 = sadd.s32 %s70, 1
      %p74 = scmp.eq.s32.totalorder %s22, 1
      %p75 = scmp.ne.s32.totalorder %s70, %s72
      %p76 = scmp.eq.s32.totalorder %s22, 0
      %p77 = por %p75, %p76
      %p78 = scmp.ne.s32.totalorder %s70, %s72
      %p79 = scmp.eq.s32.totalorder %s27, 1
      %p80 = por %p78, %p79
      %p81 = scmp.ne.s32.totalorder %s72, %s73
      %p82 = scmp.eq.s32.totalorder %s27, 0
      %p83 = por %p81, %p82
      %p84 = scmp.ne.s32.totalorder %s72, %s73
      %p85 = scmp.eq.s32.totalorder %s28, 1
      %p86 = por %p84, %p85
      %p88 = scmp.ne.s32.totalorder %s73, %s87
      %p89 = scmp.eq.s32.totalorder %s28, 0
      %p90 = por %p88, %p89
      %s92 = sadd.s32 %s91, 1
      %p95 = scmp.eq.s32.totalorder %s22, 1
      %p96 = scmp.ne.s32.totalorder %s91, %s93
      %p97 = scmp.eq.s32.totalorder %s22, 0
      %p98 = por %p96, %p97
      %p99 = scmp.ne.s32.totalorder %s91, %s93
      %p100 = scmp.eq.s32.totalorder %s27, 1
      %p101 = por %p99, %p100
      %p102 = scmp.ne.s32.totalorder %s93, %s94
      %p103 = scmp.eq.s32.totalorder %s27, 0
      %p104 = por %p102, %p103
      %p105 = scmp.ne.s32.totalorder %s93, %s94
      %p106 = scmp.eq.s32.totalorder %s28, 1
      %p107 = por %p105, %p106
      %p109 = scmp.ne.s32.totalorder %s94, %s108
      %p110 = scmp.eq.s32.totalorder %s28, 0
      %p111 = por %p109, %p110
      %s113 = sadd.s32 %s112, 1
      %p116 = scmp.eq.s32.totalorder %s22, 1
      %p117 = scmp.ne.s32.totalorder %s112, %s114
      %p118 = scmp.eq.s32.totalorder %s22, 0
      %p119 = por %p117, %p118
      %p120 = scmp.ne.s32.totalorder %s112, %s114
      %p121 = scmp.eq.s32.totalorder %s27, 1
      %p122 = por %p120, %p121
      %p123 = scmp.ne.s32.totalorder %s114, %s115
      %p124 = scmp.eq.s32.totalorder %s27, 0
      %p125 = por %p123, %p124
      %p126 = scmp.ne.s32.totalorder %s114, %s115
      %p127 = scmp.eq.s32.totalorder %s28, 1
      %p128 = por %p126, %p127
      %p130 = scmp.ne.s32.totalorder %s115, %s129
      %p131 = scmp.eq.s32.totalorder %s28, 0
      %p132 = por %p130, %p131
      %s134 = sadd.s32 %s133, 1
      %p137 = scmp.eq.s32.totalorder %s22, 1
      %p138 = scmp.ne.s32.totalorder %s133, %s135
      %p139 = scmp.eq.s32.totalorder %s22, 0
      %p140 = por %p138, %p139
      %p141 = scmp.ne.s32.totalorder %s133, %s135
      %p142 = scmp.eq.s32.totalorder %s27, 1
      %p143 = por %p141, %p142
      %p144 = scmp.ne.s32.totalorder %s135, %s136
      %p145 = scmp.eq.s32.totalorder %s27, 0
      %p146 = por %p144, %p145
      %p147 = scmp.ne.s32.totalorder %s135, %s136
      %p148 = scmp.eq.s32.totalorder %s28, 1
      %p149 = por %p147, %p148
      %p151 = scmp.ne.s32.totalorder %s136, %s150
      %p152 = scmp.eq.s32.totalorder %s28, 0
      %p153 = por %p151, %p152
      %s155 = sadd.s32 %s154, 1
      %p158 = scmp.eq.s32.totalorder %s22, 1
      %p159 = scmp.ne.s32.totalorder %s154, %s156
      %p160 = scmp.eq.s32.totalorder %s22, 0
      %p161 = por %p159, %p160
      %p162 = scmp.ne.s32.totalorder %s154, %s156
      %p163 = scmp.eq.s32.totalorder %s27, 1
      %p164 = por %p162, %p163
      %p165 = scmp.ne.s32.totalorder %s156, %s157
      %p166 = scmp.eq.s32.totalorder %s27, 0
      %p167 = por %p165, %p166
      %p168 = scmp.ne.s32.totalorder %s156, %s157
      %p169 = scmp.eq.s32.totalorder %s28, 1
      %p170 = por %p168, %p169
      %p172 = scmp.ne.s32.totalorder %s157, %s171
      %p173 = scmp.eq.s32.totalorder %s28, 0
      %p174 = por %p172, %p173
      %s176 = sadd.s32 %s175, 1
      %p179 = scmp.eq.s32.totalorder %s22, 1
      %p180 = scmp.ne.s32.totalorder %s175, %s177
      %p181 = scmp.eq.s32.totalorder %s22, 0
      %p182 = por %p180, %p181
      %p183 = scmp.ne.s32.totalorder %s175, %s177
      %p184 = scmp.eq.s32.totalorder %s27, 1
      %p185 = por %p183, %p184
      %p186 = scmp.ne.s32.totalorder %s177, %s178
      %p187 = scmp.eq.s32.totalorder %s27, 0
      %p188 = por %p186, %p187
      %p189 = scmp.ne.s32.totalorder %s177, %s178
      %p190 = scmp.eq.s32.totalorder %s28, 1
      %p191 = por %p189, %p190
      %p193 = scmp.ne.s32.totalorder %s178, %s192
      %p194 = scmp.eq.s32.totalorder %s28, 0
      %p195 = por %p193, %p194
      %s197 = sadd.s32 %s196, 1
      %p200 = scmp.eq.s32.totalorder %s22, 1
      %p201 = scmp.ne.s32.totalorder %s196, %s198
      %p202 = scmp.eq.s32.totalorder %s22, 0
      %p203 = por %p201, %p202
      %p204 = scmp.ne.s32.totalorder %s196, %s198
      %p205 = scmp.eq.s32.totalorder %s27, 1
      %p206 = por %p204, %p205
      %p207 = scmp.ne.s32.totalorder %s198, %s199
      %p208 = scmp.eq.s32.totalorder %s27, 0
      %p209 = por %p207, %p208
      %p210 = scmp.ne.s32.totalorder %s198, %s199
      %p211 = scmp.eq.s32.totalorder %s28, 1
      %p212 = por %p210, %p211
      %p214 = scmp.ne.s32.totalorder %s199, %s213
      %p215 = scmp.eq.s32.totalorder %s28, 0
      %p216 = por %p214, %p215
      %s218 = sadd.s32 %s217, 1
      %p221 = scmp.eq.s32.totalorder %s22, 1
      %p222 = scmp.ne.s32.totalorder %s217, %s219
      %p223 = scmp.eq.s32.totalorder %s22, 0
      %p224 = por %p222, %p223
      %p225 = scmp.ne.s32.totalorder %s217, %s219
      %p226 = scmp.eq.s32.totalorder %s27, 1
      %p227 = por %p225, %p226
      %p228 = scmp.ne.s32.totalorder %s219, %s220
      %p229 = scmp.eq.s32.totalorder %s27, 0
      %p230 = por %p228, %p229
      %p231 = scmp.ne.s32.totalorder %s219, %s220
      %p232 = scmp.eq.s32.totalorder %s28, 1
      %p233 = por %p231, %p232
      %p235 = scmp.ne.s32.totalorder %s220, %s234
      %p236 = scmp.eq.s32.totalorder %s28, 0
      %p237 = por %p235, %p236
      %s239 = sadd.s32 %s238, 1
      %p242 = scmp.eq.s32.totalorder %s22, 1
      %p243 = scmp.ne.s32.totalorder %s238, %s240
      %p244 = scmp.eq.s32.totalorder %s22, 0
      %p245 = por %p243, %p244
      %p246 = scmp.ne.s32.totalorder %s238, %s240
      %p247 = scmp.eq.s32.totalorder %s27, 1
      %p248 = por %p246, %p247
      %p249 = scmp.ne.s32.totalorder %s240, %s241
      %p250 = scmp.eq.s32.totalorder %s27, 0
      %p251 = por %p249, %p250
      %p252 = scmp.ne.s32.totalorder %s240, %s241
      %p253 = scmp.eq.s32.totalorder %s28, 1
      %p254 = por %p252, %p253
      %p256 = scmp.ne.s32.totalorder %s241, %s255
      %p257 = scmp.eq.s32.totalorder %s28, 0
      %p258 = por %p256, %p257
      %s260 = sadd.s32 %s259, 1
      %p263 = scmp.eq.s32.totalorder %s22, 1
      %p264 = scmp.ne.s32.totalorder %s259, %s261
      %p265 = scmp.eq.s32.totalorder %s22, 0
      %p266 = por %p264, %p265
      %p267 = scmp.ne.s32.totalorder %s259, %s261
      %p268 = scmp.eq.s32.totalorder %s27, 1
      %p269 = por %p267, %p268
      %p270 = scmp.ne.s32.totalorder %s261, %s262
      %p271 = scmp.eq.s32.totalorder %s27, 0
      %p272 = por %p270, %p271
      %p273 = scmp.ne.s32.totalorder %s261, %s262
      %p274 = scmp.eq.s32.totalorder %s28, 1
      %p275 = por %p273, %p274
      %p277 = scmp.ne.s32.totalorder %s262, %s276
      %p278 = scmp.eq.s32.totalorder %s28, 0
      %p279 = por %p277, %p278
      %s280 = ssub.s32 %s29, %s41
      %s281 = ssub.s32 %s30, %s37
      %s282 = sor.u32 %s280, %s281
      %p283 = scmp.eq.s32.totalorder %s282, 0
      %s285 = sadd.s32 %s284, 1
      %s286 = scalar_select %p283, %s284, %s285
      %p289 = pneg %p283
      %p290 = scmp.eq.s32.totalorder %s22, 1
      %p291 = por %p289, %p290
      %p292 = scmp.ne.s32.totalorder %s284, %s287
      %p293 = scmp.eq.s32.totalorder %s22, 0
      %p294 = por %p292, %p293
      %p295 = scmp.ne.s32.totalorder %s284, %s287
      %p296 = scmp.eq.s32.totalorder %s27, 1
      %p297 = por %p295, %p296
      %p298 = scmp.ne.s32.totalorder %s287, %s288
      %p299 = scmp.eq.s32.totalorder %s27, 0
      %p300 = por %p298, %p299
      %p301 = scmp.ne.s32.totalorder %s287, %s288
      %p302 = scmp.eq.s32.totalorder %s28, 1
      %p303 = por %p301, %p302
      %p305 = scmp.ne.s32.totalorder %s288, %s304
      %p306 = scmp.eq.s32.totalorder %s28, 0
      %p307 = por %p305, %p306
      %p308 = scmp.le.s32.totalorder 1, %s22
      %p309 = scmp.lt.s32.totalorder %s22, 3
      %p310 = pnand %p308, %p309
      %p311 = pneg %p310
      // Predicated region
      $region9: #{tpu_custom_call.1} parent=5 // pred_check
        _
      $region10: #{tpu_custom_call.1} parent=5 // pred_check_branch
        %313 = sbr.rel (%p310) target = $region12
      $region11: #{tpu_custom_call.1} parent=5 // pred_region
        %s314 = ssub.s32 %s22, 1
        // Predicated region
        $region13: #{tpu_custom_call.1} parent=11 // pred_check
          %p315 = pneg %p83
        $region14: #{tpu_custom_call.1} parent=11 // pred_check_branch
          %317 = sbr.rel (%p315) target = $region16
        $region15: #{tpu_custom_call.1} parent=11 // pred_region
          _
        $region16: #{tpu_custom_call.1} parent=11 // pred_fallthru
          _
        // Predicated region
        $region17: #{tpu_custom_call.1} parent=11 // pred_check
          %p318 = pneg %p104
        $region18: #{tpu_custom_call.1} parent=11 // pred_check_branch
          %320 = sbr.rel (%p318) target = $region20
        $region19: #{tpu_custom_call.1} parent=11 // pred_region
          _
        $region20: #{tpu_custom_call.1} parent=11 // pred_fallthru
          _
        // Predicated region
        $region21: #{tpu_custom_call.1} parent=11 // pred_check
          %p321 = pneg %p125
        $region22: #{tpu_custom_call.1} parent=11 // pred_check_branch
          %323 = sbr.rel (%p321) target = $region24
        $region23: #{tpu_custom_call.1} parent=11 // pred_region
          %s325 = ssub.s32 4096, 4096
          %326 = vsyncadd [#allocation3], %s325
          %s327 = sshll.u32 [#allocation2], 4
          %s328 = int_to_ptr.vmem [resolvable:$true] %s327
          %333 = dma.hbm_to_vmem [thread:$0]  %s3, 4096, %s328, [#allocation3], 256, 256, 16
        $region24: #{tpu_custom_call.1} parent=11 // pred_fallthru
          _
        // Predicated region
        $region25: #{tpu_custom_call.1} parent=11 // pred_check
          %p334 = pneg %p146
        $region26: #{tpu_custom_call.1} parent=11 // pred_check_branch
          %336 = sbr.rel (%p334) target = $region28
        $region27: #{tpu_custom_call.1} parent=11 // pred_region
          _
        $region28: #{tpu_custom_call.1} parent=11 // pred_fallthru
          _
        // Predicated region
        $region29: #{tpu_custom_call.1} parent=11 // pred_check
          %p337 = pneg %p167
        $region30: #{tpu_custom_call.1} parent=11 // pred_check_branch
          %339 = sbr.rel (%p337) target = $region32
        $region31: #{tpu_custom_call.1} parent=11 // pred_region
          _
        $region32: #{tpu_custom_call.1} parent=11 // pred_fallthru
          _
        // Predicated region
        $region33: #{tpu_custom_call.1} parent=11 // pred_check
          %p340 = pneg %p188
        $region34: #{tpu_custom_call.1} parent=11 // pred_check_branch
          %342 = sbr.rel (%p340) target = $region36
        $region35: #{tpu_custom_call.1} parent=11 // pred_region
          _
        $region36: #{tpu_custom_call.1} parent=11 // pred_fallthru
          _
        // Predicated region
        $region37: #{tpu_custom_call.1} parent=11 // pred_check
          %p343 = pneg %p209
        $region38: #{tpu_custom_call.1} parent=11 // pred_check_branch
          %345 = sbr.rel (%p343) target = $region40
        $region39: #{tpu_custom_call.1} parent=11 // pred_region
          %s347 = ssub.s32 2048, 2048
          %348 = vsyncadd [#allocation6], %s347
          %s349 = sshll.u32 [#allocation5], 4
          %s350 = int_to_ptr.vmem [resolvable:$true] %s349
          %355 = dma.hbm_to_vmem [thread:$0]  %s7, 2048, %s350, [#allocation6], 128, 128, 8
        $region40: #{tpu_custom_call.1} parent=11 // pred_fallthru
          _
        // Predicated region
        $region41: #{tpu_custom_call.1} parent=11 // pred_check
          %p356 = pneg %p230
        $region42: #{tpu_custom_call.1} parent=11 // pred_check_branch
          %358 = sbr.rel (%p356) target = $region44
        $region43: #{tpu_custom_call.1} parent=11 // pred_region
          _
        $region44: #{tpu_custom_call.1} parent=11 // pred_fallthru
          _
        // Predicated region
        $region45: #{tpu_custom_call.1} parent=11 // pred_check
          %p359 = pneg %p251
        $region46: #{tpu_custom_call.1} parent=11 // pred_check_branch
          %361 = sbr.rel (%p359) target = $region48
        $region47: #{tpu_custom_call.1} parent=11 // pred_region
          %s363 = ssub.s32 2048, 2048
          %364 = vsyncadd [#allocation6], %s363
          %s365 = sshll.u32 [#allocation7], 4
          %s366 = int_to_ptr.vmem [resolvable:$true] %s365
          %371 = dma.hbm_to_vmem [thread:$0]  %s9, 2048, %s366, [#allocation6], 128, 128, 8
        $region48: #{tpu_custom_call.1} parent=11 // pred_fallthru
          _
        // Predicated region
        $region49: #{tpu_custom_call.1} parent=11 // pred_check
          %p372 = pneg %p272
        $region50: #{tpu_custom_call.1} parent=11 // pred_check_branch
          %374 = sbr.rel (%p372) target = $region52
        $region51: #{tpu_custom_call.1} parent=11 // pred_region
          _
        $region52: #{tpu_custom_call.1} parent=11 // pred_fallthru
          _
      $region12: #{tpu_custom_call.1} parent=5 // pred_fallthru
        _
      %p375 = scmp.lt.s32.totalorder %s22, 2
      // Predicated region
      $region53: #{tpu_custom_call.1} parent=5 // pred_check
        %p376 = pneg %p375
      $region54: #{tpu_custom_call.1} parent=5 // pred_check_branch
        %378 = sbr.rel (%p376) target = $region56
      $region55: #{tpu_custom_call.1} parent=5 // pred_region
        // Predicated region
        $region57: #{tpu_custom_call.1} parent=55 // pred_check
          %p379 = pneg %p56
        $region58: #{tpu_custom_call.1} parent=55 // pred_check_branch
          %381 = sbr.rel (%p379) target = $region60
        $region59: #{tpu_custom_call.1} parent=55 // pred_region
          %p382 = scmp.lt.s32.totalorder %s29, 1
          %s383 = scalar_select %p382, %s29, 1
          %p384 = scmp.lt.s32.totalorder %s30, 0
          %s385 = scalar_select %p384, %s30, 0
          %s386 = smul.addr %s385, 3
          %s387 = smul.addr %s383, 3
          %s388 = sadd.s32 %s386, %s387
          %s389 = smul.addr %s388, 8
          %s390 = scalar_lea.vmem %s0, %s389
        $region60: #{tpu_custom_call.1} parent=55 // pred_fallthru
          _
      $region56: #{tpu_custom_call.1} parent=5 // pred_fallthru
        _
      %p391 = scmp.le.s32.totalorder 1, %s22
      %p392 = scmp.lt.s32.totalorder %s22, 3
      %p393 = pnand %p391, %p392
      %p394 = pneg %p393
      // Predicated region
      $region61: #{tpu_custom_call.1} parent=5 // pred_check
        _
      $region62: #{tpu_custom_call.1} parent=5 // pred_check_branch
        %396 = sbr.rel (%p393) target = $region64
      $region63: #{tpu_custom_call.1} parent=5 // pred_region
        %s397 = ssub.s32 %s22, 1
        // Predicated region
        $region65: #{tpu_custom_call.1} parent=63 // pred_check
          %p398 = pneg %p125
        $region66: #{tpu_custom_call.1} parent=63 // pred_check_branch
          %400 = sbr.rel (%p398) target = $region68
        $region67: #{tpu_custom_call.1} parent=63 // pred_region
          %401 = dma.done [#allocation3], 4096
        $region68: #{tpu_custom_call.1} parent=63 // pred_fallthru
          _
        // Predicated region
        $region69: #{tpu_custom_call.1} parent=63 // pred_check
          %p402 = pneg %p209
        $region70: #{tpu_custom_call.1} parent=63 // pred_check_branch
          %404 = sbr.rel (%p402) target = $region72
        $region71: #{tpu_custom_call.1} parent=63 // pred_region
          %405 = dma.done [#allocation6], 2048
        $region72: #{tpu_custom_call.1} parent=63 // pred_fallthru
          _
        // Predicated region
        $region73: #{tpu_custom_call.1} parent=63 // pred_check
          %p406 = pneg %p251
        $region74: #{tpu_custom_call.1} parent=63 // pred_check_branch
          %408 = sbr.rel (%p406) target = $region76
        $region75: #{tpu_custom_call.1} parent=63 // pred_region
          %409 = dma.done [#allocation6], 2048
        $region76: #{tpu_custom_call.1} parent=63 // pred_fallthru
          _
        %p410 = scmp.lt.s32.totalorder %s31, 1
        %s411 = scalar_select %p410, %s31, 1
        %p412 = scmp.lt.s32.totalorder %s32, 0
        %s413 = scalar_select %p412, %s32, 0
        %s414 = smul.addr %s413, 3
        %s415 = smul.addr %s411, 3
        %s416 = sadd.s32 %s414, %s415
        %s417 = smul.addr %s416, 8
        %s418 = scalar_lea.vmem %s0, %s417
        %p419 = pneg %p62
        %p420 = pneg %p59
        %p421 = pneg %p83
        %p422 = pneg %p80
        %p423 = pneg %p104
        %p424 = pneg %p101
        %p425 = pneg %p125
        %p426 = pneg %p122
        %p427 = pneg %p146
        %p428 = pneg %p143
        %p429 = pneg %p167
        %p430 = pneg %p164
        %p431 = pneg %p188
        %p432 = pneg %p185
        %p433 = pneg %p209
        %p434 = pneg %p206
        %p435 = pneg %p230
        %p436 = pneg %p227
        %p437 = pneg %p251
        %p438 = pneg %p248
        %p439 = pneg %p272
        %p440 = pneg %p269
        %p441 = pneg %p300
        %p442 = pneg %p297
        %s443 = sand.u32 %s287, 1
        %s444 = scalar_lea.sflag [#allocation4], %s443
        %s445 = sand.u32 %s287, 1
        %s446 = smul.addr %s445, 16
        %s447 = scalar_lea.vmem [#allocation8], %s446
        %p448 = scmp.lt.s32.totalorder %s31, 1
        %s449 = scalar_select %p448, %s31, 1
        %p450 = scmp.lt.s32.totalorder %s32, 0
        %s451 = scalar_select %p450, %s32, 0
        %s452 = smul.addr %s451, 3
        %s453 = smul.addr %s449, 3
        %s454 = sadd.s32 %s452, %s453
        %s455 = smul.addr %s454, 8
        %s456 = scalar_lea.vmem %s0, %s455
        %s457 = smul.u32 2, %s32
        %v458 = vld [vmem:[%s456] sm:$0xff]
        %v459 = vld [vmem:[%s456 + $0x8] sm:$0xff]
        %v460 = vld [vmem:[%s456 + $0x10] sm:$0x3]
        %461 = vadd.xlane.f32.xlu0 %v458
        %v462 = vpop.xlane.xlu0 %461
        %463 = vadd.xlane.f32.xlu0 %v459
        %v464 = vpop.xlane.xlu0 %463
        %vm465 = vcmask 1041408
        %v466 = vsel %vm465, %v460, 0.0
        %467 = vadd.xlane.f32.xlu0 %v466
        %v468 = vpop.xlane.xlu0 %467
        %v469 = vmul.f32 %v462, 0.125
        %v470 = vmul.f32 %v464, 0.125
        %v471 = vmul.f32 %v468, 0.125
        %v472 = vlaneseq
        %v473 = vand.u32 %v472, 127
        %vm474 = vcmp.lt.s32.totalorder %v473, 8
        %v475 = vsel %vm474, 1, 0
        %vm476 = vcmp.eq.s32.totalorder %v475, 1
        %v477 = vsel %vm476, %v469, 0.0
        %v478 = vsel %vm476, %v470, 0.0
        %v479 = vsel %vm476, %v471, 0.0
        %v480 = vsub.f32 %v458, %v477
        %v481 = vsub.f32 %v459, %v478
        %v482 = vsub.f32 %v460, %v479
        %v483 = vmul.f32 %v480, %v480
        %v484 = vmul.f32 %v481, %v481
        %v485 = vmul.f32 %v482, %v482
        %486 = vadd.xlane.f32.xlu0 %v483
        %v487 = vpop.xlane.xlu0 %486
        %488 = vadd.xlane.f32.xlu0 %v484
        %v489 = vpop.xlane.xlu0 %488
        %v490 = vsel %vm465, %v485, 0.0
        %491 = vadd.xlane.f32.xlu0 %v490
        %v492 = vpop.xlane.xlu0 %491
        %v493 = vmul.f32 %v487, 0.125
        %v494 = vmul.f32 %v489, 0.125
        %v495 = vmul.f32 %v492, 0.125
        %v496 = vadd.f32 %v493, 1e-05
        %v497 = vadd.f32 %v494, 1e-05
        %v498 = vadd.f32 %v495, 1e-05
        %v499 = vrsqrt.pop %v496
        %v500 = vrsqrt.pop %v497
        %v501 = vrsqrt.pop %v498
        %v502 = vmul.f32 %v480, %v499
        %v503 = vmul.f32 %v481, %v500
        %v504 = vmul.f32 %v482, %v501
        %v505 = vld [vmem:[%s1] sm:$0x1]
        %v507 = vlaneseq
        %v508 = vshrl.u32 %v507, 7
        %v509 = vsub.s32 0, %v508
        %v510 = vrot.slane %v505, %v509
        %v512 = vmul.f32 %v502, %v510
        %v513 = vmul.f32 %v503, %v510
        %v514 = vmul.f32 %v504, %v510
        %v515 = vld [vmem:[%s2] sm:$0x1]
        %v517 = vlaneseq
        %v518 = vshrl.u32 %v517, 7
        %v519 = vsub.s32 0, %v518
        %v520 = vrot.slane %v515, %v519
        %v522 = vadd.f32 %v512, %v520
        %v523 = vadd.f32 %v513, %v520
        %v524 = vadd.f32 %v514, %v520
        %v525 = vld [vmem:[#allocation2] sm:$0xff]
        %v526 = vld [vmem:[#allocation2 + $0x8] sm:$0xff]
        %v527 = vld [vmem:[#allocation2 + $0x10] sm:$0xff]
        %v528 = vld [vmem:[#allocation2 + $0x18] sm:$0xff]
        %v529 = vld [vmem:[#allocation2 + $0x20] sm:$0xff]
        %v530 = vld [vmem:[#allocation2 + $0x28] sm:$0xff]
        %v531 = vld [vmem:[#allocation2 + $0x30] sm:$0xff]
        %v532 = vld [vmem:[#allocation2 + $0x38] sm:$0xff]
        %v533 = vld [vmem:[#allocation2 + $0x40] sm:$0xff]
        %v534 = vld [vmem:[#allocation2 + $0x48] sm:$0xff]
        %v535 = vld [vmem:[#allocation2 + $0x50] sm:$0xff]
        %v536 = vld [vmem:[#allocation2 + $0x58] sm:$0xff]
        %v537 = vld [vmem:[#allocation2 + $0x60] sm:$0xff]
        %v538 = vld [vmem:[#allocation2 + $0x68] sm:$0xff]
        %v539 = vld [vmem:[#allocation2 + $0x70] sm:$0xff]
        %v540 = vld [vmem:[#allocation2 + $0x78] sm:$0xff]
        %v541 = vld [vmem:[#allocation2 + $0x80] sm:$0xff]
        %v542 = vld [vmem:[#allocation2 + $0x88] sm:$0xff]
        %v543 = vld [vmem:[#allocation2 + $0x90] sm:$0xff]
        %v544 = vld [vmem:[#allocation2 + $0x98] sm:$0xff]
        %v545 = vld [vmem:[#allocation2 + $0xa0] sm:$0xff]
        %v546 = vld [vmem:[#allocation2 + $0xa8] sm:$0xff]
        %v547 = vld [vmem:[#allocation2 + $0xb0] sm:$0xff]
        %v548 = vld [vmem:[#allocation2 + $0xb8] sm:$0xff]
        %v549 = vld [vmem:[#allocation2 + $0xc0] sm:$0xff]
        %v550 = vld [vmem:[#allocation2 + $0xc8] sm:$0xff]
        %v551 = vld [vmem:[#allocation2 + $0xd0] sm:$0xff]
        %v552 = vld [vmem:[#allocation2 + $0xd8] sm:$0xff]
        %v553 = vld [vmem:[#allocation2 + $0xe0] sm:$0xff]
        %v554 = vld [vmem:[#allocation2 + $0xe8] sm:$0xff]
        %v555 = vld [vmem:[#allocation2 + $0xf0] sm:$0xff]
        %v556 = vld [vmem:[#allocation2 + $0xf8] sm:$0xff]
        %v557 = vld [vmem:[%s4] sm:$0x3]
        %v559 = vlaneseq
        %v560 = vshrl.u32 %v559, 7
        %v561 = vsub.s32 0, %v560
        %v562 = vrot.slane %v557, %v561
        %v563 = vlaneseq
        %v564 = vshrl.u32 %v563, 7
        %v565 = vsub.s32 1, %v564
        %v566 = vrot.slane %v557, %v565
        %569 = vmatprep.subr.mxu0 %v526
        %570 = vmatpush1.msra.mxu0 %v525
        %571 = vmatprep.subr.mxu0 %v528
        %572 = vmatpush1.msra.mxu0 %v527
        %573 = vmatprep.subr.mxu0 %v530
        %574 = vmatpush1.msra.mxu0 %v529
        %575 = vmatprep.subr.mxu0 %v532
        %576 = vmatpush1.msra.mxu0 %v531
        %577 = vmatprep.subr.mxu0 %v534
        %578 = vmatpush1.msra.mxu0 %v533
        %579 = vmatprep.subr.mxu0 %v536
        %580 = vmatpush1.msra.mxu0 %v535
        %581 = vmatprep.subr.mxu0 %v538
        %582 = vmatpush1.msra.mxu0 %v537
        %583 = vmatprep.subr.mxu0 %v540
        %584 = vmatpush1.msra.mxu0 %v539
        %585 = vmatprep.subr.mxu0 %v542
        %586 = vmatpush1.msra.mxu0 %v541
        %587 = vmatprep.subr.mxu0 %v544
        %588 = vmatpush1.msra.mxu0 %v543
        %589 = vmatprep.subr.mxu0 %v546
        %590 = vmatpush1.msra.mxu0 %v545
        %591 = vmatprep.subr.mxu0 %v548
        %592 = vmatpush1.msra.mxu0 %v547
        %593 = vmatprep.subr.mxu0 %v550
        %594 = vmatpush1.msra.mxu0 %v549
        %595 = vmatprep.subr.mxu0 %v552
        %596 = vmatpush1.msra.mxu0 %v551
        %597 = vmatprep.subr.mxu0 %v554
        %598 = vmatpush1.msra.mxu0 %v553
        %599 = vmatprep.subr.mxu0 %v556
        %600 = vmatpush1.msra.mxu0 %v555
        %601 = vmatprep.subr.mxu0 0.0
        %602 = vmatpush1.msra.mxu0 0.0
        %603 = vmatprep.subr.mxu0 0.0
        %604 = vmatpush1.msra.mxu0 0.0
        %605 = vmatprep.subr.mxu0 0.0
        %606 = vmatpush1.msra.mxu0 0.0
        %607 = vmatprep.subr.mxu0 0.0
        %608 = vmatpush1.msra.mxu0 0.0
        %609 = vmatprep.subr.mxu0 0.0
        %610 = vmatpush1.msra.mxu0 0.0
        %611 = vmatprep.subr.mxu0 0.0
        %612 = vmatpush1.msra.mxu0 0.0
        %613 = vmatprep.subr.mxu0 0.0
        %614 = vmatpush1.msra.mxu0 0.0
        %615 = vmatprep.subr.mxu0 0.0
        %616 = vmatpush1.msra.mxu0 0.0
        %617 = vmatprep.subr.mxu0 0.0
        %618 = vmatpush1.msra.mxu0 0.0
        %619 = vmatprep.subr.mxu0 0.0
        %620 = vmatpush1.msra.mxu0 0.0
        %621 = vmatprep.subr.mxu0 0.0
        %622 = vmatpush1.msra.mxu0 0.0
        %623 = vmatprep.subr.mxu0 0.0
        %624 = vmatpush1.msra.mxu0 0.0
        %625 = vmatprep.subr.mxu0 0.0
        %626 = vmatpush1.msra.mxu0 0.0
        %627 = vmatprep.subr.mxu0 0.0
        %628 = vmatpush1.msra.mxu0 0.0
        %629 = vmatprep.subr.mxu0 0.0
        %630 = vmatpush1.msra.mxu0 0.0
        %631 = vmatprep.subr.mxu0 0.0
        %632 = vmatpush1.msra.mxu0 0.0
        %633 = vmatprep.mubr.f32.mxu0 0.0
        %634 = vmatmul.mubr.f32.gmra.mrb[0].mxu0 %v522
        %v635 = vpop.f32.mrb[0].mxu0
        %v636 = vadd.f32 %v562, %v635
        %v637 = vpop.f32.mrb[0].mxu0
        %v638 = vadd.f32 %v566, %v637
        %639 = vmatprep.mubr.f32.mxu0 0.0
        %640 = vmatmul.mubr.f32.gmra.mrb[0].mxu0 %v523
        %v641 = vpop.f32.mrb[0].mxu0
        %v642 = vadd.f32 %v562, %v641
        %v643 = vpop.f32.mrb[0].mxu0
        %v644 = vadd.f32 %v566, %v643
        %645 = vmatprep.mubr.f32.mxu0 0.0
        %646 = vmatmul.mubr.f32.gmra.mrb[0].mxu0 %v524
        %v647 = vpop.f32.mrb[0].mxu0
        %v648 = vadd.f32 %v562, %v647
        %v649 = vpop.f32.mrb[0].mxu0
        %v650 = vadd.f32 %v566, %v649
        %651 = vdwg.mxu0
        %v652 = vmul.f32 %v638, 0.5
        %v653 = vmul.f32 %v644, 0.5
        %v654 = vmul.f32 %v650, 0.5
        %v655 = vtanh.pop %v652
        %v656 = vtanh.pop %v653
        %v657 = vtanh.pop %v654
        %v658 = vmul.f32 %v655, 0.5
        %v659 = vmul.f32 %v656, 0.5
        %v660 = vmul.f32 %v657, 0.5
        %v661 = vadd.f32 %v658, 0.5
        %v662 = vadd.f32 %v659, 0.5
        %v663 = vadd.f32 %v660, 0.5
        %v664 = vmul.f32 %v636, %v661
        %v665 = vmul.f32 %v642, %v662
        %v666 = vmul.f32 %v648, %v663
        %v667 = vlaneseq
        %v668 = vshrl.u32 %v667, 7
        %v669 = vadd.s32 %v668, 8
        %v670 = vadd.s32 %v668, 16
        %s671 = smul.u32 %s32, 16
        %v672 = vstv %s671
        %v673 = vadd.s32 %v672, %v668
        %v674 = vadd.s32 %v672, %v669
        %v675 = vadd.s32 %v672, %v670
        %v676 = vsub.s32 %v673, 1
        %v677 = vsub.s32 %v674, 1
        %v678 = vsub.s32 %v675, 1
        %vm679 = vcmp.ge.s32.totalorder %v676, 0
        %vm680 = vcmp.ge.s32.totalorder %v677, 0
        %vm681 = vcmp.ge.s32.totalorder %v678, 0
        %vm682 = vcmp.lt.s32.totalorder %v676, 16
        %vm683 = vcmp.lt.s32.totalorder %v677, 16
        %vm684 = vcmp.lt.s32.totalorder %v678, 16
        %vm685 = vmand %vm679, %vm682
        %vm686 = vmand %vm680, %vm683
        %vm687 = vmand %vm681, %vm684
        %v688 = vsel %vm685, 1, 0
        %v689 = vsel %vm686, 1, 0
        %v690 = vsel %vm687, 1, 0
        %vm691 = vcmp.eq.s32.totalorder %v688, 1
        %vm692 = vcmp.eq.s32.totalorder %v689, 1
        %vm693 = vcmp.eq.s32.totalorder %v690, 1
        %v694 = vsel %vm691, %v664, 0.0
        %v695 = vsel %vm692, %v665, 0.0
        %v696 = vsel %vm693, %v666, 0.0
        %v697 = vld [vmem:[%s5] sm:$0x1]
        %v699 = vlaneseq
        %v700 = vshrl.u32 %v699, 7
        %v701 = vsub.s32 0, %v700
        %v702 = vrot.slane %v697, %v701
        %v704 = vmul.f32 %v694, %v702
        %v705 = vmul.f32 %v695, %v702
        %s706 = scalar_lea.vmem %s5, 1
        %v707 = vld [vmem:[%s706] sm:$0x1]
        %v709 = vlaneseq
        %v710 = vshrl.u32 %v709, 7
        %v711 = vsub.s32 0, %v710
        %v712 = vrot.slane %v707, %v711
        %v714 = vmul.f32 %v694, %v712
        %v715 = vmul.f32 %v695, %v712
        %v716 = vmul.f32 %v696, %v712
        %vm720 = vcmask 1046528
        %v721 = vrot.slane %v714, 1
        %v722 = vrot.slane %v715, 1
        %v723 = vsel %vm720, %v721, %v722
        %v724 = vrot.slane %v716, 1
        %v725 = vsel %vm720, %v722, %v724
        %v728 = vadd.f32 %v704, %v723
        %v729 = vadd.f32 %v705, %v725
        %s730 = scalar_lea.vmem %s5, 2
        %v731 = vld [vmem:[%s730] sm:$0x1]
        %v733 = vlaneseq
        %v734 = vshrl.u32 %v733, 7
        %v735 = vsub.s32 0, %v734
        %v736 = vrot.slane %v731, %v735
        %v738 = vmul.f32 %v694, %v736
        %v739 = vmul.f32 %v695, %v736
        %v740 = vmul.f32 %v696, %v736
        %vm744 = vcmask 1045504
        %v745 = vrot.slane %v738, 2
        %v746 = vrot.slane %v739, 2
        %v747 = vsel %vm744, %v745, %v746
        %v748 = vrot.slane %v740, 2
        %v749 = vsel %vm744, %v746, %v748
        %v752 = vadd.f32 %v728, %v747
        %v753 = vadd.f32 %v729, %v749
        %v754 = vld [vmem:[%s6] sm:$0x1]
        %v756 = vlaneseq
        %v757 = vshrl.u32 %v756, 7
        %v758 = vsub.s32 0, %v757
        %v759 = vrot.slane %v754, %v758
        %v761 = vadd.f32 %v752, %v759
        %v762 = vadd.f32 %v753, %v759
        %v763 = vld [vmem:[#allocation5] sm:$0xff]
        %v764 = vld [vmem:[#allocation5 + $0x8] sm:$0xff]
        %v765 = vld [vmem:[#allocation5 + $0x10] sm:$0xff]
        %v766 = vld [vmem:[#allocation5 + $0x18] sm:$0xff]
        %v767 = vld [vmem:[#allocation5 + $0x20] sm:$0xff]
        %v768 = vld [vmem:[#allocation5 + $0x28] sm:$0xff]
        %v769 = vld [vmem:[#allocation5 + $0x30] sm:$0xff]
        %v770 = vld [vmem:[#allocation5 + $0x38] sm:$0xff]
        %v771 = vld [vmem:[#allocation5 + $0x40] sm:$0xff]
        %v772 = vld [vmem:[#allocation5 + $0x48] sm:$0xff]
        %v773 = vld [vmem:[#allocation5 + $0x50] sm:$0xff]
        %v774 = vld [vmem:[#allocation5 + $0x58] sm:$0xff]
        %v775 = vld [vmem:[#allocation5 + $0x60] sm:$0xff]
        %v776 = vld [vmem:[#allocation5 + $0x68] sm:$0xff]
        %v777 = vld [vmem:[#allocation5 + $0x70] sm:$0xff]
        %v778 = vld [vmem:[#allocation5 + $0x78] sm:$0xff]
        %v779 = vld [vmem:[%s8] sm:$0x1]
        %v781 = vlaneseq
        %v782 = vshrl.u32 %v781, 7
        %v783 = vsub.s32 0, %v782
        %v784 = vrot.slane %v779, %v783
        %786 = vmatprep.subr.mxu0 0.0
        %787 = vmatpush1.msra.mxu0 %v763
        %788 = vmatprep.subr.mxu0 0.0
        %789 = vmatpush1.msra.mxu0 %v764
        %790 = vmatprep.subr.mxu0 0.0
        %791 = vmatpush1.msra.mxu0 %v765
        %792 = vmatprep.subr.mxu0 0.0
        %793 = vmatpush1.msra.mxu0 %v766
        %794 = vmatprep.subr.mxu0 0.0
        %795 = vmatpush1.msra.mxu0 %v767
        %796 = vmatprep.subr.mxu0 0.0
        %797 = vmatpush1.msra.mxu0 %v768
        %798 = vmatprep.subr.mxu0 0.0
        %799 = vmatpush1.msra.mxu0 %v769
        %800 = vmatprep.subr.mxu0 0.0
        %801 = vmatpush1.msra.mxu0 %v770
        %802 = vmatprep.subr.mxu0 0.0
        %803 = vmatpush1.msra.mxu0 %v771
        %804 = vmatprep.subr.mxu0 0.0
        %805 = vmatpush1.msra.mxu0 %v772
        %806 = vmatprep.subr.mxu0 0.0
        %807 = vmatpush1.msra.mxu0 %v773
        %808 = vmatprep.subr.mxu0 0.0
        %809 = vmatpush1.msra.mxu0 %v774
        %810 = vmatprep.subr.mxu0 0.0
        %811 = vmatpush1.msra.mxu0 %v775
        %812 = vmatprep.subr.mxu0 0.0
        %813 = vmatpush1.msra.mxu0 %v776
        %814 = vmatprep.subr.mxu0 0.0
        %815 = vmatpush1.msra.mxu0 %v777
        %816 = vmatprep.subr.mxu0 0.0
        %817 = vmatpush1.msra.mxu0 %v778
        %818 = vmatprep.subr.mxu0 0.0
        %819 = vmatpush1.msra.mxu0 0.0
        %820 = vmatprep.subr.mxu0 0.0
        %821 = vmatpush1.msra.mxu0 0.0
        %822 = vmatprep.subr.mxu0 0.0
        %823 = vmatpush1.msra.mxu0 0.0
        %824 = vmatprep.subr.mxu0 0.0
        %825 = vmatpush1.msra.mxu0 0.0
        %826 = vmatprep.subr.mxu0 0.0
        %827 = vmatpush1.msra.mxu0 0.0
        %828 = vmatprep.subr.mxu0 0.0
        %829 = vmatpush1.msra.mxu0 0.0
        %830 = vmatprep.subr.mxu0 0.0
        %831 = vmatpush1.msra.mxu0 0.0
        %832 = vmatprep.subr.mxu0 0.0
        %833 = vmatpush1.msra.mxu0 0.0
        %834 = vmatprep.subr.mxu0 0.0
        %835 = vmatpush1.msra.mxu0 0.0
        %836 = vmatprep.subr.mxu0 0.0
        %837 = vmatpush1.msra.mxu0 0.0
        %838 = vmatprep.subr.mxu0 0.0
        %839 = vmatpush1.msra.mxu0 0.0
        %840 = vmatprep.subr.mxu0 0.0
        %841 = vmatpush1.msra.mxu0 0.0
        %842 = vmatprep.subr.mxu0 0.0
        %843 = vmatpush1.msra.mxu0 0.0
        %844 = vmatprep.subr.mxu0 0.0
        %845 = vmatpush1.msra.mxu0 0.0
        %846 = vmatprep.subr.mxu0 0.0
        %847 = vmatpush1.msra.mxu0 0.0
        %848 = vmatprep.subr.mxu0 0.0
        %849 = vmatpush1.msra.mxu0 0.0
        %850 = vmatprep.mubr.f32.mxu0 0.0
        %851 = vmatmul.mubr.f32.gmra.mrb[0].mxu0 %v761
        %v852 = vpop.f32.mrb[0].mxu0
        %v853 = vadd.f32 %v784, %v852
        %v854 = vpop.f32.mrb[0].mxu0
        %855 = vmatprep.mubr.f32.mxu0 0.0
        %856 = vmatmul.mubr.f32.gmra.mrb[0].mxu0 %v762
        %v857 = vpop.f32.mrb[0].mxu0
        %v858 = vadd.f32 %v784, %v857
        %v859 = vpop.f32.mrb[0].mxu0
        %860 = vdwg.mxu0
        %v861 = vmul.f32 %v853, 0.5
        %v862 = vmul.f32 %v858, 0.5
        %v863 = vmul.f32 %v853, 0.70710677
        %v864 = vmul.f32 %v858, 0.70710677
        %v865 = vand.u32 2147483647, %v863
        %v866 = vand.u32 2147483647, %v864
        %v867 = vmul.f32 %v865, 0.3275911
        %v868 = vmul.f32 %v866, 0.3275911
        %v869 = vadd.f32 %v867, 1.0
        %v870 = vadd.f32 %v868, 1.0
        %v871 = vrcp.pop %v869
        %v872 = vrcp.pop %v870
        %v873 = vmul.f32 %v871, 1.0614054
        %v874 = vmul.f32 %v872, 1.0614054
        %v875 = vadd.f32 %v873, -1.4531521
        %v876 = vadd.f32 %v874, -1.4531521
        %v877 = vmul.f32 %v875, %v871
        %v878 = vmul.f32 %v876, %v872
        %v879 = vadd.f32 %v877, 1.4214138
        %v880 = vadd.f32 %v878, 1.4214138
        %v881 = vmul.f32 %v879, %v871
        %v882 = vmul.f32 %v880, %v872
        %v883 = vadd.f32 %v881, -0.28449672
        %v884 = vadd.f32 %v882, -0.28449672
        %v885 = vmul.f32 %v883, %v871
        %v886 = vmul.f32 %v884, %v872
        %v887 = vadd.f32 %v885, 0.2548296
        %v888 = vadd.f32 %v886, 0.2548296
        %v889 = vmul.f32 %v887, %v871
        %v890 = vmul.f32 %v888, %v872
        %v891 = vsub.f32 0.0, %v865
        %v892 = vsub.f32 0.0, %v866
        %v893 = vmul.f32 %v891, %v865
        %v894 = vmul.f32 %v892, %v866
        %v895 = vmul.f32 %v893, 1.442695
        %v896 = vpow.pop %v895
        %v897 = vmul.f32 %v894, 1.442695
        %v898 = vpow.pop %v897
        %v899 = vmul.f32 %v889, %v896
        %v900 = vmul.f32 %v890, %v898
        %v901 = vsub.f32 1.0, %v899
        %v902 = vsub.f32 1.0, %v900
        %vm903 = vcmp.ge.f32.partialorder %v863, 0.0
        %vm904 = vcmp.ge.f32.partialorder %v864, 0.0
        %v905 = vsub.f32 0.0, %v901
        %v906 = vsub.f32 0.0, %v902
        %v907 = vsel %vm903, %v901, %v905
        %v908 = vsel %vm904, %v902, %v906
        %v909 = vadd.f32 %v907, 1.0
        %v910 = vadd.f32 %v908, 1.0
        %v911 = vmul.f32 %v861, %v909
        %v912 = vmul.f32 %v862, %v910
        %v913 = vld [vmem:[#allocation7] sm:$0xff]
        %v914 = vld [vmem:[#allocation7 + $0x8] sm:$0xff]
        %v915 = vld [vmem:[#allocation7 + $0x10] sm:$0xff]
        %v916 = vld [vmem:[#allocation7 + $0x18] sm:$0xff]
        %v917 = vld [vmem:[#allocation7 + $0x20] sm:$0xff]
        %v918 = vld [vmem:[#allocation7 + $0x28] sm:$0xff]
        %v919 = vld [vmem:[#allocation7 + $0x30] sm:$0xff]
        %v920 = vld [vmem:[#allocation7 + $0x38] sm:$0xff]
        %v921 = vld [vmem:[#allocation7 + $0x40] sm:$0xff]
        %v922 = vld [vmem:[#allocation7 + $0x48] sm:$0xff]
        %v923 = vld [vmem:[#allocation7 + $0x50] sm:$0xff]
        %v924 = vld [vmem:[#allocation7 + $0x58] sm:$0xff]
        %v925 = vld [vmem:[#allocation7 + $0x60] sm:$0xff]
        %v926 = vld [vmem:[#allocation7 + $0x68] sm:$0xff]
        %v927 = vld [vmem:[#allocation7 + $0x70] sm:$0xff]
        %v928 = vld [vmem:[#allocation7 + $0x78] sm:$0xff]
        %v929 = vld [vmem:[%s10] sm:$0x1]
        %v931 = vlaneseq
        %v932 = vshrl.u32 %v931, 7
        %v933 = vsub.s32 0, %v932
        %v934 = vrot.slane %v929, %v933
        %936 = vmatprep.subr.mxu0 0.0
        %937 = vmatpush1.msra.mxu0 %v913
        %938 = vmatprep.subr.mxu0 0.0
        %939 = vmatpush1.msra.mxu0 %v914
        %940 = vmatprep.subr.mxu0 0.0
        %941 = vmatpush1.msra.mxu0 %v915
        %942 = vmatprep.subr.mxu0 0.0
        %943 = vmatpush1.msra.mxu0 %v916
        %944 = vmatprep.subr.mxu0 0.0
        %945 = vmatpush1.msra.mxu0 %v917
        %946 = vmatprep.subr.mxu0 0.0
        %947 = vmatpush1.msra.mxu0 %v918
        %948 = vmatprep.subr.mxu0 0.0
        %949 = vmatpush1.msra.mxu0 %v919
        %950 = vmatprep.subr.mxu0 0.0
        %951 = vmatpush1.msra.mxu0 %v920
        %952 = vmatprep.subr.mxu0 0.0
        %953 = vmatpush1.msra.mxu0 %v921
        %954 = vmatprep.subr.mxu0 0.0
        %955 = vmatpush1.msra.mxu0 %v922
        %956 = vmatprep.subr.mxu0 0.0
        %957 = vmatpush1.msra.mxu0 %v923
        %958 = vmatprep.subr.mxu0 0.0
        %959 = vmatpush1.msra.mxu0 %v924
        %960 = vmatprep.subr.mxu0 0.0
        %961 = vmatpush1.msra.mxu0 %v925
        %962 = vmatprep.subr.mxu0 0.0
        %963 = vmatpush1.msra.mxu0 %v926
        %964 = vmatprep.subr.mxu0 0.0
        %965 = vmatpush1.msra.mxu0 %v927
        %966 = vmatprep.subr.mxu0 0.0
        %967 = vmatpush1.msra.mxu0 %v928
        %968 = vmatprep.subr.mxu0 0.0
        %969 = vmatpush1.msra.mxu0 0.0
        %970 = vmatprep.subr.mxu0 0.0
        %971 = vmatpush1.msra.mxu0 0.0
        %972 = vmatprep.subr.mxu0 0.0
        %973 = vmatpush1.msra.mxu0 0.0
        %974 = vmatprep.subr.mxu0 0.0
        %975 = vmatpush1.msra.mxu0 0.0
        %976 = vmatprep.subr.mxu0 0.0
        %977 = vmatpush1.msra.mxu0 0.0
        %978 = vmatprep.subr.mxu0 0.0
        %979 = vmatpush1.msra.mxu0 0.0
        %980 = vmatprep.subr.mxu0 0.0
        %981 = vmatpush1.msra.mxu0 0.0
        %982 = vmatprep.subr.mxu0 0.0
        %983 = vmatpush1.msra.mxu0 0.0
        %984 = vmatprep.subr.mxu0 0.0
        %985 = vmatpush1.msra.mxu0 0.0
        %986 = vmatprep.subr.mxu0 0.0
        %987 = vmatpush1.msra.mxu0 0.0
        %988 = vmatprep.subr.mxu0 0.0
        %989 = vmatpush1.msra.mxu0 0.0
        %990 = vmatprep.subr.mxu0 0.0
        %991 = vmatpush1.msra.mxu0 0.0
        %992 = vmatprep.subr.mxu0 0.0
        %993 = vmatpush1.msra.mxu0 0.0
        %994 = vmatprep.subr.mxu0 0.0
        %995 = vmatpush1.msra.mxu0 0.0
        %996 = vmatprep.subr.mxu0 0.0
        %997 = vmatpush1.msra.mxu0 0.0
        %998 = vmatprep.subr.mxu0 0.0
        %999 = vmatpush1.msra.mxu0 0.0
        %1000 = vmatprep.mubr.f32.mxu0 0.0
        %1001 = vmatmul.mubr.f32.gmra.mrb[0].mxu0 %v911
        %v1002 = vpop.f32.mrb[0].mxu0
        %v1003 = vadd.f32 %v934, %v1002
        %v1004 = vpop.f32.mrb[0].mxu0
        %1005 = vmatprep.mubr.f32.mxu0 0.0
        %1006 = vmatmul.mubr.f32.gmra.mrb[0].mxu0 %v912
        %v1007 = vpop.f32.mrb[0].mxu0
        %v1008 = vadd.f32 %v934, %v1007
        %v1009 = vpop.f32.mrb[0].mxu0
        %1010 = vdwg.mxu0
        %vm1013 = vcmask 1040384
        %v1014 = vrot.slane %v1003, 7
        %v1015 = vrot.slane %v1008, 7
        %v1016 = vsel %vm1013, %v1014, %v1015
        %v1020 = vadd.f32 %v458, %v1014
        %v1021 = vadd.f32 %v459, %v1016
        %v1022 = vadd.f32 %v460, %v1015
        %1023 = vst [vmem:[%s447 - $0x1] sm:$0xfe] %v1020
        %1024 = vst [vmem:[%s447 + $0x7] sm:$0xff] %v1021
        %1025 = vst [vmem:[%s447 + $0xf] sm:$0x1] %v1022
        %s1026 = sand.u32 %s287, 1
        %s1027 = scalar_lea.sflag [#allocation4], %s1026
        %s1028 = sand.u32 %s287, 1
        %s1029 = smul.addr %s1028, 16
        %s1030 = scalar_lea.vmem [#allocation8], %s1029
        // Predicated region
        $region77: #{tpu_custom_call.1} parent=63 // pred_check
          %p1031 = pneg %p297
        $region78: #{tpu_custom_call.1} parent=63 // pred_check_branch
          %1033 = sbr.rel (%p1031) target = $region80
        $region79: #{tpu_custom_call.1} parent=63 // pred_region
          %s1034 = smul.u32 2, %s32
          %s1036 = ssub.s32 256, 256
          %1037 = vsyncadd %s1027, %s1036
          %s1038 = smul.addr %s31, 2
          %s1039 = sadd.s32 %s1034, %s1038
          %s1040 = smul.addr %s1039, 128
          %s1041 = scalar_lea.hbm %s11, %s1040
          %s1042 = sshll.u32 %s1030, 4
          %s1043 = int_to_ptr.vmem [resolvable:$true] %s1042
          %1048 = dma.vmem_to_hbm [thread:$0]  %s1043, 256, %s1041, %s1027, 128, 128, 8
        $region80: #{tpu_custom_call.1} parent=63 // pred_fallthru
          _
      $region64: #{tpu_custom_call.1} parent=5 // pred_fallthru
        _
      %p1049 = scmp.le.s32.totalorder 2, %s22
      // Predicated region
      $region81: #{tpu_custom_call.1} parent=5 // pred_check
        %p1050 = pneg %p1049
      $region82: #{tpu_custom_call.1} parent=5 // pred_check_branch
        %1052 = sbr.rel (%p1050) target = $region84
      $region83: #{tpu_custom_call.1} parent=5 // pred_region
        %s1053 = ssub.s32 %s22, 2
        // Predicated region
        $region85: #{tpu_custom_call.1} parent=83 // pred_check
          %p1054 = pneg %p303
        $region86: #{tpu_custom_call.1} parent=83 // pred_check_branch
          %1056 = sbr.rel (%p1054) target = $region88
        $region87: #{tpu_custom_call.1} parent=83 // pred_region
          %s1057 = sand.u32 %s288, 1
          %s1058 = scalar_lea.sflag [#allocation4], %s1057
          %s1059 = sand.u32 %s288, 1
          %s1060 = smul.addr %s1059, 16
          %s1061 = scalar_lea.vmem [#allocation8], %s1060
          %1062 = dma.done %s1058, 256
        $region88: #{tpu_custom_call.1} parent=83 // pred_fallthru
          _
      $region84: #{tpu_custom_call.1} parent=5 // pred_fallthru
        _
    $region6: #{tpu_custom_call.1} parent=1 // loop_footer
      %s26 = sadd.s32 1, %s22
    $region7: #{tpu_custom_call.1} parent=1 // loop_footer_branch
      %21 = sbr.rel target = $region3
    $region8: #{tpu_custom_call.1} parent=1 // loop_exit
      _
    %1063 = vsyncpa [#allocation3], 1
    %s1064 = scalar_lea.sflag [#allocation3], 1
    %1065 = vsyncpa %s1064, 1
    %1066 = vsyncpa [#allocation6], 1
    %1067 = vsyncpa [#allocation4], 1
    %s1068 = scalar_lea.sflag [#allocation4], 1
    %1069 = vsyncpa %s1068, 1

// kernel: tpu_custom_call.1
$region0: #{tpu_custom_call.1}
  #allocation0 [shape = 'u32[]', space=smem, size = 0x4, offset = 0x4, fixed_abs, tag = 'smem constant byte address 0x4 - core index']
  #allocation1 [shape = 'u32[144,128]{1,0:T(1,128)}', space=vmem, size = 0x12000, scoped, tag = 'internal scratch']
  %s0 = inlined_call_operand.vmem [shape: f32[2,1,18,128], index: 0, kind: input, shape index: {}]
  %s1 = inlined_call_operand.vmem [shape: f32[1,128], index: 1, kind: input, shape index: {}]
  %s2 = inlined_call_operand.vmem [shape: f32[1,128], index: 2, kind: input, shape index: {}]
  %s3 = inlined_call_operand.hbm [shape: f32[128,256], index: 3, kind: input, shape index: {}]
  %s4 = inlined_call_operand.vmem [shape: f32[1,256], index: 4, kind: input, shape index: {}]
  %s5 = inlined_call_operand.vmem [shape: f32[3,1,128], index: 5, kind: input, shape index: {}]
  %s6 = inlined_call_operand.vmem [shape: f32[1,128], index: 6, kind: input, shape index: {}]
  %s7 = inlined_call_operand.hbm [shape: f32[128,128], index: 7, kind: input, shape index: {}]
  %s8 = inlined_call_operand.vmem [shape: f32[1,128], index: 8, kind: input, shape index: {}]
  %s9 = inlined_call_operand.hbm [shape: f32[128,128], index: 9, kind: input, shape index: {}]
  %s10 = inlined_call_operand.vmem [shape: f32[1,128], index: 10, kind: input, shape index: {}]
  %s11 = inlined_call_operand.hbm [shape: f32[2,16,128], index: 11, kind: output, shape index: {}]
  %s12 = sld [smem:[#allocation0]]
  $region89: #{tpu_custom_call.1} parent=0
    _
  %s14 = ssub.s32 1, %s12
  %s15 = scalar_select 0, %s14, %s12
  $region1: #{tpu_custom_call.1} parent=0
    #allocation2 [shape = 'u8[131072]{0}', space=vmem, size = 0x20000, scoped, tag = 'input window, operand 3, single buffered']
    #allocation3 [shape = 's32[2]{0}', space=sflag, size = 0x8, scoped, tag = 'scoped memory for tpu_custom_call.1']
    #allocation4 [shape = 's32[2]{0}', space=sflag, size = 0x8, scoped, tag = 'scoped memory for tpu_custom_call.1']
    #allocation5 [shape = 'u8[65536]{0}', space=vmem, size = 0x10000, scoped, tag = 'input window, operand 7, single buffered']
    #allocation6 [shape = 's32[1]{0}', space=sflag, size = 0x4, scoped, tag = 'scoped memory for tpu_custom_call.1']
    #allocation7 [shape = 'u8[65536]{0}', space=vmem, size = 0x10000, scoped, tag = 'input window, operand 9, single buffered']
    #allocation8 [shape = 'u8[16384]{0}', space=vmem, size = 0x4000, scoped, tag = 'output window, operand 0']
    %16 = vsyncpa [#allocation3], 0
    %17 = vsyncpa [#allocation6], 0
    %18 = vsyncpa [#allocation4], 0
    %s19 = scalar_lea.sflag [#allocation4], 1
    %20 = vsyncpa %s19, 0
    loop: start=0, step=1, limit=4
    $region2: #{tpu_custom_call.1} parent=1 // loop_pre_header
      _
    $region3: #{tpu_custom_call.1} parent=1 // loop_header
      %s22 = sphi 0, %s26
      %p23 = scmp.ge.s32.totalorder %s22, 4
      %s29 = sphi 0, %s41
      %s30 = sphi 0, %s37
      %s31 = sphi 0, %s29
      %s32 = sphi 0, %s30
      %s33 = sphi 0, %s31
      %s34 = sphi 0, %s32
      %s46 = sphi 0, %s48
      %s49 = sphi 0, %s46
      %s50 = sphi 0, %s49
      %s66 = sphi 0, %s50
      %s70 = sphi 0, %s70
      %s72 = sphi 0, %s70
      %s73 = sphi 0, %s72
      %s87 = sphi 0, %s73
      %s91 = sphi 0, %s91
      %s93 = sphi 0, %s91
      %s94 = sphi 0, %s93
      %s108 = sphi 0, %s94
      %s112 = sphi 0, %s112
      %s114 = sphi 0, %s112
      %s115 = sphi 0, %s114
      %s129 = sphi 0, %s115
      %s133 = sphi 0, %s133
      %s135 = sphi 0, %s133
      %s136 = sphi 0, %s135
      %s150 = sphi 0, %s136
      %s154 = sphi 0, %s154
      %s156 = sphi 0, %s154
      %s157 = sphi 0, %s156
      %s171 = sphi 0, %s157
      %s175 = sphi 0, %s175
      %s177 = sphi 0, %s175
      %s178 = sphi 0, %s177
      %s192 = sphi 0, %s178
      %s196 = sphi 0, %s196
      %s198 = sphi 0, %s196
      %s199 = sphi 0, %s198
      %s213 = sphi 0, %s199
      %s217 = sphi 0, %s217
      %s219 = sphi 0, %s217
      %s220 = sphi 0, %s219
      %s234 = sphi 0, %s220
      %s238 = sphi 0, %s238
      %s240 = sphi 0, %s238
      %s241 = sphi 0, %s240
      %s255 = sphi 0, %s241
      %s259 = sphi 0, %s259
      %s261 = sphi 0, %s259
      %s262 = sphi 0, %s261
      %s276 = sphi 0, %s262
      %s284 = sphi 0, %s286
      %s287 = sphi 0, %s284
      %s288 = sphi 0, %s287
      %s304 = sphi 0, %s288
    $region4: #{tpu_custom_call.1} parent=1 // loop_header_branch
      %25 = sbr.rel (%p23) target = $region8
    $region5: #{tpu_custom_call.1} parent=1 // loop_body
      %s27 = ssub.s32 %s22, 1
      %s28 = ssub.s32 %s22, 2
      %s35 = sadd.s32 1, %s30
      %p36 = scmp.ge.s32.totalorder %s35, 1
      %s37 = scalar_select %p36, 0, %s35
      %s38 = sadd.s32 1, %s29
      %s39 = scalar_select %p36, %s38, %s29
      %p40 = scmp.ge.s32.totalorder %s39, 2
      %s41 = scalar_select %p40, 0, %s39
      %s42 = ssub.s32 %s29, %s41
      %s43 = ssub.s32 %s30, %s37
      %s44 = sor.u32 %s42, %s43
      %p45 = scmp.eq.s32.totalorder %s44, 0
      %s47 = sadd.s32 %s46, 1
      %s48 = scalar_select %p45, %s46, %s47
      %p51 = pneg %p45
      %p52 = scmp.eq.s32.totalorder %s22, 1
      %p53 = por %p51, %p52
      %p54 = scmp.ne.s32.totalorder %s46, %s49
      %p55 = scmp.eq.s32.totalorder %s22, 0
      %p56 = por %p54, %p55
      %p57 = scmp.ne.s32.totalorder %s46, %s49
      %p58 = scmp.eq.s32.totalorder %s27, 1
      %p59 = por %p57, %p58
      %p60 = scmp.ne.s32.totalorder %s49, %s50
      %p61 = scmp.eq.s32.totalorder %s27, 0
      %p62 = por %p60, %p61
      %p63 = scmp.ne.s32.totalorder %s49, %s50
      %p64 = scmp.eq.s32.totalorder %s28, 1
      %p65 = por %p63, %p64
      %p67 = scmp.ne.s32.totalorder %s50, %s66
      %p68 = scmp.eq.s32.totalorder %s28, 0
      %p69 = por %p67, %p68
      %s71 = sadd.s32 %s70, 1
      %p74 = scmp.eq.s32.totalorder %s22, 1
      %p75 = scmp.ne.s32.totalorder %s70, %s72
      %p76 = scmp.eq.s32.totalorder %s22, 0
      %p77 = por %p75, %p76
      %p78 = scmp.ne.s32.totalorder %s70, %s72
      %p79 = scmp.eq.s32.totalorder %s27, 1
      %p80 = por %p78, %p79
      %p81 = scmp.ne.s32.totalorder %s72, %s73
      %p82 = scmp.eq.s32.totalorder %s27, 0
      %p83 = por %p81, %p82
      %p84 = scmp.ne.s32.totalorder %s72, %s73
      %p85 = scmp.eq.s32.totalorder %s28, 1
      %p86 = por %p84, %p85
      %p88 = scmp.ne.s32.totalorder %s73, %s87
      %p89 = scmp.eq.s32.totalorder %s28, 0
      %p90 = por %p88, %p89
      %s92 = sadd.s32 %s91, 1
      %p95 = scmp.eq.s32.totalorder %s22, 1
      %p96 = scmp.ne.s32.totalorder %s91, %s93
      %p97 = scmp.eq.s32.totalorder %s22, 0
      %p98 = por %p96, %p97
      %p99 = scmp.ne.s32.totalorder %s91, %s93
      %p100 = scmp.eq.s32.totalorder %s27, 1
      %p101 = por %p99, %p100
      %p102 = scmp.ne.s32.totalorder %s93, %s94
      %p103 = scmp.eq.s32.totalorder %s27, 0
      %p104 = por %p102, %p103
      %p105 = scmp.ne.s32.totalorder %s93, %s94
      %p106 = scmp.eq.s32.totalorder %s28, 1
      %p107 = por %p105, %p106
      %p109 = scmp.ne.s32.totalorder %s94, %s108
      %p110 = scmp.eq.s32.totalorder %s28, 0
      %p111 = por %p109, %p110
      %s113 = sadd.s32 %s112, 1
      %p116 = scmp.eq.s32.totalorder %s22, 1
      %p117 = scmp.ne.s32.totalorder %s112, %s114
      %p118 = scmp.eq.s32.totalorder %s22, 0
      %p119 = por %p117, %p118
      %p120 = scmp.ne.s32.totalorder %s112, %s114
      %p121 = scmp.eq.s32.totalorder %s27, 1
      %p122 = por %p120, %p121
      %p123 = scmp.ne.s32.totalorder %s114, %s115
      %p124 = scmp.eq.s32.totalorder %s27, 0
      %p125 = por %p123, %p124
      %p126 = scmp.ne.s32.totalorder %s114, %s115
      %p127 = scmp.eq.s32.totalorder %s28, 1
      %p128 = por %p126, %p127
      %p130 = scmp.ne.s32.totalorder %s115, %s129
      %p131 = scmp.eq.s32.totalorder %s28, 0
      %p132 = por %p130, %p131
      %s134 = sadd.s32 %s133, 1
      %p137 = scmp.eq.s32.totalorder %s22, 1
      %p138 = scmp.ne.s32.totalorder %s133, %s135
      %p139 = scmp.eq.s32.totalorder %s22, 0
      %p140 = por %p138, %p139
      %p141 = scmp.ne.s32.totalorder %s133, %s135
      %p142 = scmp.eq.s32.totalorder %s27, 1
      %p143 = por %p141, %p142
      %p144 = scmp.ne.s32.totalorder %s135, %s136
      %p145 = scmp.eq.s32.totalorder %s27, 0
      %p146 = por %p144, %p145
      %p147 = scmp.ne.s32.totalorder %s135, %s136
      %p148 = scmp.eq.s32.totalorder %s28, 1
      %p149 = por %p147, %p148
      %p151 = scmp.ne.s32.totalorder %s136, %s150
      %p152 = scmp.eq.s32.totalorder %s28, 0
      %p153 = por %p151, %p152
      %s155 = sadd.s32 %s154, 1
      %p158 = scmp.eq.s32.totalorder %s22, 1
      %p159 = scmp.ne.s32.totalorder %s154, %s156
      %p160 = scmp.eq.s32.totalorder %s22, 0
      %p161 = por %p159, %p160
      %p162 = scmp.ne.s32.totalorder %s154, %s156
      %p163 = scmp.eq.s32.totalorder %s27, 1
      %p164 = por %p162, %p163
      %p165 = scmp.ne.s32.totalorder %s156, %s157
      %p166 = scmp.eq.s32.totalorder %s27, 0
      %p167 = por %p165, %p166
      %p168 = scmp.ne.s32.totalorder %s156, %s157
      %p169 = scmp.eq.s32.totalorder %s28, 1
      %p170 = por %p168, %p169
      %p172 = scmp.ne.s32.totalorder %s157, %s171
      %p173 = scmp.eq.s32.totalorder %s28, 0
      %p174 = por %p172, %p173
      %s176 = sadd.s32 %s175, 1
      %p179 = scmp.eq.s32.totalorder %s22, 1
      %p180 = scmp.ne.s32.totalorder %s175, %s177
      %p181 = scmp.eq.s32.totalorder %s22, 0
      %p182 = por %p180, %p181
      %p183 = scmp.ne.s32.totalorder %s175, %s177
      %p184 = scmp.eq.s32.totalorder %s27, 1
      %p185 = por %p183, %p184
      %p186 = scmp.ne.s32.totalorder %s177, %s178
      %p187 = scmp.eq.s32.totalorder %s27, 0
      %p188 = por %p186, %p187
      %p189 = scmp.ne.s32.totalorder %s177, %s178
      %p190 = scmp.eq.s32.totalorder %s28, 1
      %p191 = por %p189, %p190
      %p193 = scmp.ne.s32.totalorder %s178, %s192
      %p194 = scmp.eq.s32.totalorder %s28, 0
      %p195 = por %p193, %p194
      %s197 = sadd.s32 %s196, 1
      %p200 = scmp.eq.s32.totalorder %s22, 1
      %p201 = scmp.ne.s32.totalorder %s196, %s198
      %p202 = scmp.eq.s32.totalorder %s22, 0
      %p203 = por %p201, %p202
      %p204 = scmp.ne.s32.totalorder %s196, %s198
      %p205 = scmp.eq.s32.totalorder %s27, 1
      %p206 = por %p204, %p205
      %p207 = scmp.ne.s32.totalorder %s198, %s199
      %p208 = scmp.eq.s32.totalorder %s27, 0
      %p209 = por %p207, %p208
      %p210 = scmp.ne.s32.totalorder %s198, %s199
      %p211 = scmp.eq.s32.totalorder %s28, 1
      %p212 = por %p210, %p211
      %p214 = scmp.ne.s32.totalorder %s199, %s213
      %p215 = scmp.eq.s32.totalorder %s28, 0
      %p216 = por %p214, %p215
      %s218 = sadd.s32 %s217, 1
      %p221 = scmp.eq.s32.totalorder %s22, 1
      %p222 = scmp.ne.s32.totalorder %s217, %s219
      %p223 = scmp.eq.s32.totalorder %s22, 0
      %p224 = por %p222, %p223
      %p225 = scmp.ne.s32.totalorder %s217, %s219
      %p226 = scmp.eq.s32.totalorder %s27, 1
      %p227 = por %p225, %p226
      %p228 = scmp.ne.s32.totalorder %s219, %s220
      %p229 = scmp.eq.s32.totalorder %s27, 0
      %p230 = por %p228, %p229
      %p231 = scmp.ne.s32.totalorder %s219, %s220
      %p232 = scmp.eq.s32.totalorder %s28, 1
      %p233 = por %p231, %p232
      %p235 = scmp.ne.s32.totalorder %s220, %s234
      %p236 = scmp.eq.s32.totalorder %s28, 0
      %p237 = por %p235, %p236
      %s239 = sadd.s32 %s238, 1
      %p242 = scmp.eq.s32.totalorder %s22, 1
      %p243 = scmp.ne.s32.totalorder %s238, %s240
      %p244 = scmp.eq.s32.totalorder %s22, 0
      %p245 = por %p243, %p244
      %p246 = scmp.ne.s32.totalorder %s238, %s240
      %p247 = scmp.eq.s32.totalorder %s27, 1
      %p248 = por %p246, %p247
      %p249 = scmp.ne.s32.totalorder %s240, %s241
      %p250 = scmp.eq.s32.totalorder %s27, 0
      %p251 = por %p249, %p250
      %p252 = scmp.ne.s32.totalorder %s240, %s241
      %p253 = scmp.eq.s32.totalorder %s28, 1
      %p254 = por %p252, %p253
      %p256 = scmp.ne.s32.totalorder %s241, %s255
      %p257 = scmp.eq.s32.totalorder %s28, 0
      %p258 = por %p256, %p257
      %s260 = sadd.s32 %s259, 1
      %p263 = scmp.eq.s32.totalorder %s22, 1
      %p264 = scmp.ne.s32.totalorder %s259, %s261
      %p265 = scmp.eq.s32.totalorder %s22, 0
      %p266 = por %p264, %p265
      %p267 = scmp.ne.s32.totalorder %s259, %s261
      %p268 = scmp.eq.s32.totalorder %s27, 1
      %p269 = por %p267, %p268
      %p270 = scmp.ne.s32.totalorder %s261, %s262
      %p271 = scmp.eq.s32.totalorder %s27, 0
      %p272 = por %p270, %p271
      %p273 = scmp.ne.s32.totalorder %s261, %s262
      %p274 = scmp.eq.s32.totalorder %s28, 1
      %p275 = por %p273, %p274
      %p277 = scmp.ne.s32.totalorder %s262, %s276
      %p278 = scmp.eq.s32.totalorder %s28, 0
      %p279 = por %p277, %p278
      %s280 = ssub.s32 %s29, %s41
      %s281 = ssub.s32 %s30, %s37
      %s282 = sor.u32 %s280, %s281
      %p283 = scmp.eq.s32.totalorder %s282, 0
      %s285 = sadd.s32 %s284, 1
      %s286 = scalar_select %p283, %s284, %s285
      %p289 = pneg %p283
      %p290 = scmp.eq.s32.totalorder %s22, 1
      %p291 = por %p289, %p290
      %p292 = scmp.ne.s32.totalorder %s284, %s287
      %p293 = scmp.eq.s32.totalorder %s22, 0
      %p294 = por %p292, %p293
      %p295 = scmp.ne.s32.totalorder %s284, %s287
      %p296 = scmp.eq.s32.totalorder %s27, 1
      %p297 = por %p295, %p296
      %p298 = scmp.ne.s32.totalorder %s287, %s288
      %p299 = scmp.eq.s32.totalorder %s27, 0
      %p300 = por %p298, %p299
      %p301 = scmp.ne.s32.totalorder %s287, %s288
      %p302 = scmp.eq.s32.totalorder %s28, 1
      %p303 = por %p301, %p302
      %p305 = scmp.ne.s32.totalorder %s288, %s304
      %p306 = scmp.eq.s32.totalorder %s28, 0
      %p307 = por %p305, %p306
      %p308 = scmp.le.s32.totalorder 1, %s22
      %p309 = scmp.lt.s32.totalorder %s22, 3
      %p310 = pnand %p308, %p309
      %p311 = pneg %p310
      // Predicated region
      $region9: #{tpu_custom_call.1} parent=5 // pred_check
        _
      $region10: #{tpu_custom_call.1} parent=5 // pred_check_branch
        %313 = sbr.rel (%p310) target = $region12
      $region11: #{tpu_custom_call.1} parent=5 // pred_region
        %s314 = ssub.s32 %s22, 1
        // Predicated region
        $region13: #{tpu_custom_call.1} parent=11 // pred_check
          %p315 = pneg %p83
        $region14: #{tpu_custom_call.1} parent=11 // pred_check_branch
          %317 = sbr.rel (%p315) target = $region16
        $region15: #{tpu_custom_call.1} parent=11 // pred_region
          _
        $region16: #{tpu_custom_call.1} parent=11 // pred_fallthru
          _
        // Predicated region
        $region17: #{tpu_custom_call.1} parent=11 // pred_check
          %p318 = pneg %p104
        $region18: #{tpu_custom_call.1} parent=11 // pred_check_branch
          %320 = sbr.rel (%p318) target = $region20
        $region19: #{tpu_custom_call.1} parent=11 // pred_region
          _
        $region20: #{tpu_custom_call.1} parent=11 // pred_fallthru
          _
        // Predicated region
        $region21: #{tpu_custom_call.1} parent=11 // pred_check
          %p321 = pneg %p125
        $region22: #{tpu_custom_call.1} parent=11 // pred_check_branch
          %323 = sbr.rel (%p321) target = $region24
        $region23: #{tpu_custom_call.1} parent=11 // pred_region
          %s325 = ssub.s32 4096, 4096
          %326 = vsyncadd [#allocation3], %s325
          %s327 = sshll.u32 [#allocation2], 4
          %s328 = int_to_ptr.vmem [resolvable:$true] %s327
          %333 = dma.hbm_to_vmem [thread:$0]  %s3, 4096, %s328, [#allocation3], 256, 256, 16
        $region24: #{tpu_custom_call.1} parent=11 // pred_fallthru
          _
        // Predicated region
        $region25: #{tpu_custom_call.1} parent=11 // pred_check
          %p334 = pneg %p146
        $region26: #{tpu_custom_call.1} parent=11 // pred_check_branch
          %336 = sbr.rel (%p334) target = $region28
        $region27: #{tpu_custom_call.1} parent=11 // pred_region
          _
        $region28: #{tpu_custom_call.1} parent=11 // pred_fallthru
          _
        // Predicated region
        $region29: #{tpu_custom_call.1} parent=11 // pred_check
          %p337 = pneg %p167
        $region30: #{tpu_custom_call.1} parent=11 // pred_check_branch
          %339 = sbr.rel (%p337) target = $region32
        $region31: #{tpu_custom_call.1} parent=11 // pred_region
          _
        $region32: #{tpu_custom_call.1} parent=11 // pred_fallthru
          _
        // Predicated region
        $region33: #{tpu_custom_call.1} parent=11 // pred_check
          %p340 = pneg %p188
        $region34: #{tpu_custom_call.1} parent=11 // pred_check_branch
          %342 = sbr.rel (%p340) target = $region36
        $region35: #{tpu_custom_call.1} parent=11 // pred_region
          _
        $region36: #{tpu_custom_call.1} parent=11 // pred_fallthru
          _
        // Predicated region
        $region37: #{tpu_custom_call.1} parent=11 // pred_check
          %p343 = pneg %p209
        $region38: #{tpu_custom_call.1} parent=11 // pred_check_branch
          %345 = sbr.rel (%p343) target = $region40
        $region39: #{tpu_custom_call.1} parent=11 // pred_region
          %s347 = ssub.s32 2048, 2048
          %348 = vsyncadd [#allocation6], %s347
          %s349 = sshll.u32 [#allocation5], 4
          %s350 = int_to_ptr.vmem [resolvable:$true] %s349
          %355 = dma.hbm_to_vmem [thread:$0]  %s7, 2048, %s350, [#allocation6], 128, 128, 8
        $region40: #{tpu_custom_call.1} parent=11 // pred_fallthru
          _
        // Predicated region
        $region41: #{tpu_custom_call.1} parent=11 // pred_check
          %p356 = pneg %p230
        $region42: #{tpu_custom_call.1} parent=11 // pred_check_branch
          %358 = sbr.rel (%p356) target = $region44
        $region43: #{tpu_custom_call.1} parent=11 // pred_region
          _
        $region44: #{tpu_custom_call.1} parent=11 // pred_fallthru
          _
        // Predicated region
        $region45: #{tpu_custom_call.1} parent=11 // pred_check
          %p359 = pneg %p251
        $region46: #{tpu_custom_call.1} parent=11 // pred_check_branch
          %361 = sbr.rel (%p359) target = $region48
        $region47: #{tpu_custom_call.1} parent=11 // pred_region
          %s363 = ssub.s32 2048, 2048
          %364 = vsyncadd [#allocation6], %s363
          %s365 = sshll.u32 [#allocation7], 4
          %s366 = int_to_ptr.vmem [resolvable:$true] %s365
          %371 = dma.hbm_to_vmem [thread:$0]  %s9, 2048, %s366, [#allocation6], 128, 128, 8
        $region48: #{tpu_custom_call.1} parent=11 // pred_fallthru
          _
        // Predicated region
        $region49: #{tpu_custom_call.1} parent=11 // pred_check
          %p372 = pneg %p272
        $region50: #{tpu_custom_call.1} parent=11 // pred_check_branch
          %374 = sbr.rel (%p372) target = $region52
        $region51: #{tpu_custom_call.1} parent=11 // pred_region
          _
        $region52: #{tpu_custom_call.1} parent=11 // pred_fallthru
          _
      $region12: #{tpu_custom_call.1} parent=5 // pred_fallthru
        _
      %p375 = scmp.lt.s32.totalorder %s22, 2
      // Predicated region
      $region53: #{tpu_custom_call.1} parent=5 // pred_check
        %p376 = pneg %p375
      $region54: #{tpu_custom_call.1} parent=5 // pred_check_branch
        %378 = sbr.rel (%p376) target = $region56
      $region55: #{tpu_custom_call.1} parent=5 // pred_region
        // Predicated region
        $region57: #{tpu_custom_call.1} parent=55 // pred_check
          %p379 = pneg %p56
        $region58: #{tpu_custom_call.1} parent=55 // pred_check_branch
          %381 = sbr.rel (%p379) target = $region60
        $region59: #{tpu_custom_call.1} parent=55 // pred_region
          %p382 = scmp.lt.s32.totalorder %s29, 1
          %s383 = scalar_select %p382, %s29, 1
          %p384 = scmp.lt.s32.totalorder %s30, 0
          %s385 = scalar_select %p384, %s30, 0
          %s386 = smul.addr %s385, 3
          %s387 = smul.addr %s383, 3
          %s388 = sadd.s32 %s386, %s387
          %s389 = smul.addr %s388, 8
          %s390 = scalar_lea.vmem %s0, %s389
        $region60: #{tpu_custom_call.1} parent=55 // pred_fallthru
          _
      $region56: #{tpu_custom_call.1} parent=5 // pred_fallthru
        _
      %p391 = scmp.le.s32.totalorder 1, %s22
      %p392 = scmp.lt.s32.totalorder %s22, 3
      %p393 = pnand %p391, %p392
      %p394 = pneg %p393
      // Predicated region
      $region61: #{tpu_custom_call.1} parent=5 // pred_check
        _
      $region62: #{tpu_custom_call.1} parent=5 // pred_check_branch
        %396 = sbr.rel (%p393) target = $region64
      $region63: #{tpu_custom_call.1} parent=5 // pred_region
        %s397 = ssub.s32 %s22, 1
        // Predicated region
        $region65: #{tpu_custom_call.1} parent=63 // pred_check
          %p398 = pneg %p125
        $region66: #{tpu_custom_call.1} parent=63 // pred_check_branch
          %400 = sbr.rel (%p398) target = $region68
        $region67: #{tpu_custom_call.1} parent=63 // pred_region
          %401 = dma.done [#allocation3], 4096
        $region68: #{tpu_custom_call.1} parent=63 // pred_fallthru
          _
        // Predicated region
        $region69: #{tpu_custom_call.1} parent=63 // pred_check
          %p402 = pneg %p209
        $region70: #{tpu_custom_call.1} parent=63 // pred_check_branch
          %404 = sbr.rel (%p402) target = $region72
        $region71: #{tpu_custom_call.1} parent=63 // pred_region
          %405 = dma.done [#allocation6], 2048
        $region72: #{tpu_custom_call.1} parent=63 // pred_fallthru
          _
        // Predicated region
        $region73: #{tpu_custom_call.1} parent=63 // pred_check
          %p406 = pneg %p251
        $region74: #{tpu_custom_call.1} parent=63 // pred_check_branch
          %408 = sbr.rel (%p406) target = $region76
        $region75: #{tpu_custom_call.1} parent=63 // pred_region
          %409 = dma.done [#allocation6], 2048
        $region76: #{tpu_custom_call.1} parent=63 // pred_fallthru
          _
        %p410 = scmp.lt.s32.totalorder %s31, 1
        %s411 = scalar_select %p410, %s31, 1
        %p412 = scmp.lt.s32.totalorder %s32, 0
        %s413 = scalar_select %p412, %s32, 0
        %s414 = smul.addr %s413, 3
        %s415 = smul.addr %s411, 3
        %s416 = sadd.s32 %s414, %s415
        %s417 = smul.addr %s416, 8
        %s418 = scalar_lea.vmem %s0, %s417
        %p419 = pneg %p62
        %p420 = pneg %p59
        %p421 = pneg %p83
        %p422 = pneg %p80
        %p423 = pneg %p104
        %p424 = pneg %p101
        %p425 = pneg %p125
        %p426 = pneg %p122
        %p427 = pneg %p146
        %p428 = pneg %p143
        %p429 = pneg %p167
        %p430 = pneg %p164
        %p431 = pneg %p188
        %p432 = pneg %p185
        %p433 = pneg %p209
        %p434 = pneg %p206
        %p435 = pneg %p230
        %p436 = pneg %p227
        %p437 = pneg %p251
        %p438 = pneg %p248
        %p439 = pneg %p272
        %p440 = pneg %p269
        %p441 = pneg %p300
        %p442 = pneg %p297
        %s443 = sand.u32 %s287, 1
        %s444 = scalar_lea.sflag [#allocation4], %s443
        %s445 = sand.u32 %s287, 1
        %s446 = smul.addr %s445, 16
        %s447 = scalar_lea.vmem [#allocation8], %s446
        %p448 = scmp.lt.s32.totalorder %s31, 1
        %s449 = scalar_select %p448, %s31, 1
        %p450 = scmp.lt.s32.totalorder %s32, 0
        %s451 = scalar_select %p450, %s32, 0
        %s452 = smul.addr %s451, 3
        %s453 = smul.addr %s449, 3
        %s454 = sadd.s32 %s452, %s453
        %s455 = smul.addr %s454, 8
        %s456 = scalar_lea.vmem %s0, %s455
        %s457 = smul.u32 2, %s32
        %v458 = vld [vmem:[%s456] sm:$0xff]
        %v459 = vld [vmem:[%s456 + $0x8] sm:$0xff]
        %v460 = vld [vmem:[%s456 + $0x10] sm:$0x3]
        %461 = vadd.xlane.f32.xlu0 %v458
        %v462 = vpop.xlane.xlu0 %461
        %463 = vadd.xlane.f32.xlu0 %v459
        %v464 = vpop.xlane.xlu0 %463
        %vm465 = vcmask 1041408
        %v466 = vsel %vm465, %v460, 0.0
        %467 = vadd.xlane.f32.xlu0 %v466
        %v468 = vpop.xlane.xlu0 %467
        %v469 = vmul.f32 %v462, 0.125
        %v470 = vmul.f32 %v464, 0.125
        %v471 = vmul.f32 %v468, 0.125
        %v472 = vlaneseq
        %v473 = vand.u32 %v472, 127
        %vm474 = vcmp.lt.s32.totalorder %v473, 8
        %v475 = vsel %vm474, 1, 0
        %vm476 = vcmp.eq.s32.totalorder %v475, 1
        %v477 = vsel %vm476, %v469, 0.0
        %v478 = vsel %vm476, %v470, 0.0
        %v479 = vsel %vm476, %v471, 0.0
        %v480 = vsub.f32 %v458, %v477
        %v481 = vsub.f32 %v459, %v478
        %v482 = vsub.f32 %v460, %v479
        %v483 = vmul.f32 %v480, %v480
        %v484 = vmul.f32 %v481, %v481
        %v485 = vmul.f32 %v482, %v482
        %486 = vadd.xlane.f32.xlu0 %v483
        %v487 = vpop.xlane.xlu0 %486
        %488 = vadd.xlane.f32.xlu0 %v484
        %v489 = vpop.xlane.xlu0 %488
        %v490 = vsel %vm465, %v485, 0.0
        %491 = vadd.xlane.f32.xlu0 %v490
        %v492 = vpop.xlane.xlu0 %491
        %v493 = vmul.f32 %v487, 0.125
        %v494 = vmul.f32 %v489, 0.125
        %v495 = vmul.f32 %v492, 0.125
        %v496 = vadd.f32 %v493, 1e-05
        %v497 = vadd.f32 %v494, 1e-05
        %v498 = vadd.f32 %v495, 1e-05
        %v499 = vrsqrt.pop %v496
        %v500 = vrsqrt.pop %v497
        %v501 = vrsqrt.pop %v498
        %v502 = vmul.f32 %v480, %v499
        %v503 = vmul.f32 %v481, %v500
        %v504 = vmul.f32 %v482, %v501
        %v505 = vld [vmem:[%s1] sm:$0x1]
        %v507 = vlaneseq
        %v508 = vshrl.u32 %v507, 7
        %v509 = vsub.s32 0, %v508
        %v510 = vrot.slane %v505, %v509
        %v512 = vmul.f32 %v502, %v510
        %v513 = vmul.f32 %v503, %v510
        %v514 = vmul.f32 %v504, %v510
        %v515 = vld [vmem:[%s2] sm:$0x1]
        %v517 = vlaneseq
        %v518 = vshrl.u32 %v517, 7
        %v519 = vsub.s32 0, %v518
        %v520 = vrot.slane %v515, %v519
        %v522 = vadd.f32 %v512, %v520
        %v523 = vadd.f32 %v513, %v520
        %v524 = vadd.f32 %v514, %v520
        %v525 = vld [vmem:[#allocation2] sm:$0xff]
        %v526 = vld [vmem:[#allocation2 + $0x8] sm:$0xff]
        %v527 = vld [vmem:[#allocation2 + $0x10] sm:$0xff]
        %v528 = vld [vmem:[#allocation2 + $0x18] sm:$0xff]
        %v529 = vld [vmem:[#allocation2 + $0x20] sm:$0xff]
        %v530 = vld [vmem:[#allocation2 + $0x28] sm:$0xff]
        %v531 = vld [vmem:[#allocation2 + $0x30] sm:$0xff]
        %v532 = vld [vmem:[#allocation2 + $0x38] sm:$0xff]
        %v533 = vld [vmem:[#allocation2 + $0x40] sm:$0xff]
        %v534 = vld [vmem:[#allocation2 + $0x48] sm:$0xff]
        %v535 = vld [vmem:[#allocation2 + $0x50] sm:$0xff]
        %v536 = vld [vmem:[#allocation2 + $0x58] sm:$0xff]
        %v537 = vld [vmem:[#allocation2 + $0x60] sm:$0xff]
        %v538 = vld [vmem:[#allocation2 + $0x68] sm:$0xff]
        %v539 = vld [vmem:[#allocation2 + $0x70] sm:$0xff]
        %v540 = vld [vmem:[#allocation2 + $0x78] sm:$0xff]
        %v541 = vld [vmem:[#allocation2 + $0x80] sm:$0xff]
        %v542 = vld [vmem:[#allocation2 + $0x88] sm:$0xff]
        %v543 = vld [vmem:[#allocation2 + $0x90] sm:$0xff]
        %v544 = vld [vmem:[#allocation2 + $0x98] sm:$0xff]
        %v545 = vld [vmem:[#allocation2 + $0xa0] sm:$0xff]
        %v546 = vld [vmem:[#allocation2 + $0xa8] sm:$0xff]
        %v547 = vld [vmem:[#allocation2 + $0xb0] sm:$0xff]
        %v548 = vld [vmem:[#allocation2 + $0xb8] sm:$0xff]
        %v549 = vld [vmem:[#allocation2 + $0xc0] sm:$0xff]
        %v550 = vld [vmem:[#allocation2 + $0xc8] sm:$0xff]
        %v551 = vld [vmem:[#allocation2 + $0xd0] sm:$0xff]
        %v552 = vld [vmem:[#allocation2 + $0xd8] sm:$0xff]
        %v553 = vld [vmem:[#allocation2 + $0xe0] sm:$0xff]
        %v554 = vld [vmem:[#allocation2 + $0xe8] sm:$0xff]
        %v555 = vld [vmem:[#allocation2 + $0xf0] sm:$0xff]
        %v556 = vld [vmem:[#allocation2 + $0xf8] sm:$0xff]
        %v557 = vld [vmem:[%s4] sm:$0x3]
        %v559 = vlaneseq
        %v560 = vshrl.u32 %v559, 7
        %v561 = vsub.s32 0, %v560
        %v562 = vrot.slane %v557, %v561
        %v563 = vlaneseq
        %v564 = vshrl.u32 %v563, 7
        %v565 = vsub.s32 1, %v564
        %v566 = vrot.slane %v557, %v565
        %569 = vmatprep.subr.mxu0 %v526
        %570 = vmatpush1.msra.mxu0 %v525
        %571 = vmatprep.subr.mxu0 %v528
        %572 = vmatpush1.msra.mxu0 %v527
        %573 = vmatprep.subr.mxu0 %v530
        %574 = vmatpush1.msra.mxu0 %v529
        %575 = vmatprep.subr.mxu0 %v532
        %576 = vmatpush1.msra.mxu0 %v531
        %577 = vmatprep.subr.mxu0 %v534
        %578 = vmatpush1.msra.mxu0 %v533
        %579 = vmatprep.subr.mxu0 %v536
        %580 = vmatpush1.msra.mxu0 %v535
        %581 = vmatprep.subr.mxu0 %v538
        %582 = vmatpush1.msra.mxu0 %v537
        %583 = vmatprep.subr.mxu0 %v540
        %584 = vmatpush1.msra.mxu0 %v539
        %585 = vmatprep.subr.mxu0 %v542
        %586 = vmatpush1.msra.mxu0 %v541
        %587 = vmatprep.subr.mxu0 %v544
        %588 = vmatpush1.msra.mxu0 %v543
        %589 = vmatprep.subr.mxu0 %v546
        %590 = vmatpush1.msra.mxu0 %v545
        %591 = vmatprep.subr.mxu0 %v548
        %592 = vmatpush1.msra.mxu0 %v547
        %593 = vmatprep.subr.mxu0 %v550
        %594 = vmatpush1.msra.mxu0 %v549
        %595 = vmatprep.subr.mxu0 %v552
        %596 = vmatpush1.msra.mxu0 %v551
        %597 = vmatprep.subr.mxu0 %v554
        %598 = vmatpush1.msra.mxu0 %v553
        %599 = vmatprep.subr.mxu0 %v556
        %600 = vmatpush1.msra.mxu0 %v555
        %601 = vmatprep.subr.mxu0 0.0
        %602 = vmatpush1.msra.mxu0 0.0
        %603 = vmatprep.subr.mxu0 0.0
        %604 = vmatpush1.msra.mxu0 0.0
        %605 = vmatprep.subr.mxu0 0.0
        %606 = vmatpush1.msra.mxu0 0.0
        %607 = vmatprep.subr.mxu0 0.0
        %608 = vmatpush1.msra.mxu0 0.0
        %609 = vmatprep.subr.mxu0 0.0
        %610 = vmatpush1.msra.mxu0 0.0
        %611 = vmatprep.subr.mxu0 0.0
        %612 = vmatpush1.msra.mxu0 0.0
        %613 = vmatprep.subr.mxu0 0.0
        %614 = vmatpush1.msra.mxu0 0.0
        %615 = vmatprep.subr.mxu0 0.0
        %616 = vmatpush1.msra.mxu0 0.0
        %617 = vmatprep.subr.mxu0 0.0
        %618 = vmatpush1.msra.mxu0 0.0
        %619 = vmatprep.subr.mxu0 0.0
        %620 = vmatpush1.msra.mxu0 0.0
        %621 = vmatprep.subr.mxu0 0.0
        %622 = vmatpush1.msra.mxu0 0.0
        %623 = vmatprep.subr.mxu0 0.0
        %624 = vmatpush1.msra.mxu0 0.0
        %625 = vmatprep.subr.mxu0 0.0
        %626 = vmatpush1.msra.mxu0 0.0
        %627 = vmatprep.subr.mxu0 0.0
        %628 = vmatpush1.msra.mxu0 0.0
        %629 = vmatprep.subr.mxu0 0.0
        %630 = vmatpush1.msra.mxu0 0.0
        %631 = vmatprep.subr.mxu0 0.0
        %632 = vmatpush1.msra.mxu0 0.0
        %633 = vmatprep.mubr.f32.mxu0 0.0
        %634 = vmatmul.mubr.f32.gmra.mrb[0].mxu0 %v522
        %v635 = vpop.f32.mrb[0].mxu0
        %v636 = vadd.f32 %v562, %v635
        %v637 = vpop.f32.mrb[0].mxu0
        %v638 = vadd.f32 %v566, %v637
        %639 = vmatprep.mubr.f32.mxu0 0.0
        %640 = vmatmul.mubr.f32.gmra.mrb[0].mxu0 %v523
        %v641 = vpop.f32.mrb[0].mxu0
        %v642 = vadd.f32 %v562, %v641
        %v643 = vpop.f32.mrb[0].mxu0
        %v644 = vadd.f32 %v566, %v643
        %645 = vmatprep.mubr.f32.mxu0 0.0
        %646 = vmatmul.mubr.f32.gmra.mrb[0].mxu0 %v524
        %v647 = vpop.f32.mrb[0].mxu0
        %v648 = vadd.f32 %v562, %v647
        %v649 = vpop.f32.mrb[0].mxu0
        %v650 = vadd.f32 %v566, %v649
        %651 = vdwg.mxu0
        %v652 = vmul.f32 %v638, 0.5
        %v653 = vmul.f32 %v644, 0.5
        %v654 = vmul.f32 %v650, 0.5
        %v655 = vtanh.pop %v652
        %v656 = vtanh.pop %v653
        %v657 = vtanh.pop %v654
        %v658 = vmul.f32 %v655, 0.5
        %v659 = vmul.f32 %v656, 0.5
        %v660 = vmul.f32 %v657, 0.5
        %v661 = vadd.f32 %v658, 0.5
        %v662 = vadd.f32 %v659, 0.5
        %v663 = vadd.f32 %v660, 0.5
        %v664 = vmul.f32 %v636, %v661
        %v665 = vmul.f32 %v642, %v662
        %v666 = vmul.f32 %v648, %v663
        %v667 = vlaneseq
        %v668 = vshrl.u32 %v667, 7
        %v669 = vadd.s32 %v668, 8
        %v670 = vadd.s32 %v668, 16
        %s671 = smul.u32 %s32, 16
        %v672 = vstv %s671
        %v673 = vadd.s32 %v672, %v668
        %v674 = vadd.s32 %v672, %v669
        %v675 = vadd.s32 %v672, %v670
        %v676 = vsub.s32 %v673, 1
        %v677 = vsub.s32 %v674, 1
        %v678 = vsub.s32 %v675, 1
        %vm679 = vcmp.ge.s32.totalorder %v676, 0
        %vm680 = vcmp.ge.s32.totalorder %v677, 0
        %vm681 = vcmp.ge.s32.totalorder %v678, 0
        %vm682 = vcmp.lt.s32.totalorder %v676, 16
        %vm683 = vcmp.lt.s32.totalorder %v677, 16
        %vm684 = vcmp.lt.s32.totalorder %v678, 16
        %vm685 = vmand %vm679, %vm682
        %vm686 = vmand %vm680, %vm683
        %vm687 = vmand %vm681, %vm684
        %v688 = vsel %vm685, 1, 0
        %v689 = vsel %vm686, 1, 0
        %v690 = vsel %vm687, 1, 0
        %vm691 = vcmp.eq.s32.totalorder %v688, 1
        %vm692 = vcmp.eq.s32.totalorder %v689, 1
        %vm693 = vcmp.eq.s32.totalorder %v690, 1
        %v694 = vsel %vm691, %v664, 0.0
        %v695 = vsel %vm692, %v665, 0.0
        %v696 = vsel %vm693, %v666, 0.0
        %v697 = vld [vmem:[%s5] sm:$0x1]
        %v699 = vlaneseq
        %v700 = vshrl.u32 %v699, 7
        %v701 = vsub.s32 0, %v700
        %v702 = vrot.slane %v697, %v701
        %v704 = vmul.f32 %v694, %v702
        %v705 = vmul.f32 %v695, %v702
        %s706 = scalar_lea.vmem %s5, 1
        %v707 = vld [vmem:[%s706] sm:$0x1]
        %v709 = vlaneseq
        %v710 = vshrl.u32 %v709, 7
        %v711 = vsub.s32 0, %v710
        %v712 = vrot.slane %v707, %v711
        %v714 = vmul.f32 %v694, %v712
        %v715 = vmul.f32 %v695, %v712
        %v716 = vmul.f32 %v696, %v712
        %vm720 = vcmask 1046528
        %v721 = vrot.slane %v714, 1
        %v722 = vrot.slane %v715, 1
        %v723 = vsel %vm720, %v721, %v722
        %v724 = vrot.slane %v716, 1
        %v725 = vsel %vm720, %v722, %v724
        %v728 = vadd.f32 %v704, %v723
        %v729 = vadd.f32 %v705, %v725
        %s730 = scalar_lea.vmem %s5, 2
        %v731 = vld [vmem:[%s730] sm:$0x1]
        %v733 = vlaneseq
        %v734 = vshrl.u32 %v733, 7
        %v735 = vsub.s32 0, %v734
        %v736 = vrot.slane %v731, %v735
        %v738 = vmul.f32 %v694, %v736
        %v739 = vmul.f32 %v695, %v736
        %v740 = vmul.f32 %v696, %v736
        %vm744 = vcmask 1045504
        %v745 = vrot.slane %v738, 2
        %v746 = vrot.slane %v739, 2
        %v747 = vsel %vm744, %v745, %v746
        %v748 = vrot.slane %v740, 2
        %v749 = vsel %vm744, %v746, %v748
        %v752 = vadd.f32 %v728, %v747
        %v753 = vadd.f32 %v729, %v749
        %v754 = vld [vmem:[%s6] sm:$0x1]
        %v756 = vlaneseq
        %v757 = vshrl.u32 %v756, 7
        %v758 = vsub.s32 0, %v757
        %v759 = vrot.slane %v754, %v758
        %v761 = vadd.f32 %v752, %v759
        %v762 = vadd.f32 %v753, %v759
        %v763 = vld [vmem:[#allocation5] sm:$0xff]
        %v764 = vld [vmem:[#allocation5 + $0x8] sm:$0xff]
        %v765 = vld [vmem:[#allocation5 + $0x10] sm:$0xff]
        %v766 = vld [vmem:[#allocation5 + $0x18] sm:$0xff]
        %v767 = vld [vmem:[#allocation5 + $0x20] sm:$0xff]
        %v768 = vld [vmem:[#allocation5 + $0x28] sm:$0xff]
        %v769 = vld [vmem:[#allocation5 + $0x30] sm:$0xff]
        %v770 = vld [vmem:[#allocation5 + $0x38] sm:$0xff]
        %v771 = vld [vmem:[#allocation5 + $0x40] sm:$0xff]
        %v772 = vld [vmem:[#allocation5 + $0x48] sm:$0xff]
        %v773 = vld [vmem:[#allocation5 + $0x50] sm:$0xff]
        %v774 = vld [vmem:[#allocation5 + $0x58] sm:$0xff]
        %v775 = vld [vmem:[#allocation5 + $0x60] sm:$0xff]
        %v776 = vld [vmem:[#allocation5 + $0x68] sm:$0xff]
        %v777 = vld [vmem:[#allocation5 + $0x70] sm:$0xff]
        %v778 = vld [vmem:[#allocation5 + $0x78] sm:$0xff]
        %v779 = vld [vmem:[%s8] sm:$0x1]
        %v781 = vlaneseq
        %v782 = vshrl.u32 %v781, 7
        %v783 = vsub.s32 0, %v782
        %v784 = vrot.slane %v779, %v783
        %786 = vmatprep.subr.mxu0 0.0
        %787 = vmatpush1.msra.mxu0 %v763
        %788 = vmatprep.subr.mxu0 0.0
        %789 = vmatpush1.msra.mxu0 %v764
        %790 = vmatprep.subr.mxu0 0.0
        %791 = vmatpush1.msra.mxu0 %v765
        %792 = vmatprep.subr.mxu0 0.0
        %793 = vmatpush1.msra.mxu0 %v766
        %794 = vmatprep.subr.mxu0 0.0
        %795 = vmatpush1.msra.mxu0 %v767
        %796 = vmatprep.subr.mxu0 0.0
        %797 = vmatpush1.msra.mxu0 %v768
        %798 = vmatprep.subr.mxu0 0.0
        %799 = vmatpush1.msra.mxu0 %v769
        %800 = vmatprep.subr.mxu0 0.0
        %801 = vmatpush1.msra.mxu0 %v770
        %802 = vmatprep.subr.mxu0 0.0
        %803 = vmatpush1.msra.mxu0 %v771
        %804 = vmatprep.subr.mxu0 0.0
        %805 = vmatpush1.msra.mxu0 %v772
        %806 = vmatprep.subr.mxu0 0.0
        %807 = vmatpush1.msra.mxu0 %v773
        %808 = vmatprep.subr.mxu0 0.0
        %809 = vmatpush1.msra.mxu0 %v774
        %810 = vmatprep.subr.mxu0 0.0
        %811 = vmatpush1.msra.mxu0 %v775
        %812 = vmatprep.subr.mxu0 0.0
        %813 = vmatpush1.msra.mxu0 %v776
        %814 = vmatprep.subr.mxu0 0.0
        %815 = vmatpush1.msra.mxu0 %v777
        %816 = vmatprep.subr.mxu0 0.0
        %817 = vmatpush1.msra.mxu0 %v778
        %818 = vmatprep.subr.mxu0 0.0
        %819 = vmatpush1.msra.mxu0 0.0
        %820 = vmatprep.subr.mxu0 0.0
        %821 = vmatpush1.msra.mxu0 0.0
        %822 = vmatprep.subr.mxu0 0.0
        %823 = vmatpush1.msra.mxu0 0.0
        %824 = vmatprep.subr.mxu0 0.0
        %825 = vmatpush1.msra.mxu0 0.0
        %826 = vmatprep.subr.mxu0 0.0
        %827 = vmatpush1.msra.mxu0 0.0
        %828 = vmatprep.subr.mxu0 0.0
        %829 = vmatpush1.msra.mxu0 0.0
        %830 = vmatprep.subr.mxu0 0.0
        %831 = vmatpush1.msra.mxu0 0.0
        %832 = vmatprep.subr.mxu0 0.0
        %833 = vmatpush1.msra.mxu0 0.0
        %834 = vmatprep.subr.mxu0 0.0
        %835 = vmatpush1.msra.mxu0 0.0
        %836 = vmatprep.subr.mxu0 0.0
        %837 = vmatpush1.msra.mxu0 0.0
        %838 = vmatprep.subr.mxu0 0.0
        %839 = vmatpush1.msra.mxu0 0.0
        %840 = vmatprep.subr.mxu0 0.0
        %841 = vmatpush1.msra.mxu0 0.0
        %842 = vmatprep.subr.mxu0 0.0
        %843 = vmatpush1.msra.mxu0 0.0
        %844 = vmatprep.subr.mxu0 0.0
        %845 = vmatpush1.msra.mxu0 0.0
        %846 = vmatprep.subr.mxu0 0.0
        %847 = vmatpush1.msra.mxu0 0.0
        %848 = vmatprep.subr.mxu0 0.0
        %849 = vmatpush1.msra.mxu0 0.0
        %850 = vmatprep.mubr.f32.mxu0 0.0
        %851 = vmatmul.mubr.f32.gmra.mrb[0].mxu0 %v761
        %v852 = vpop.f32.mrb[0].mxu0
        %v853 = vadd.f32 %v784, %v852
        %v854 = vpop.f32.mrb[0].mxu0
        %855 = vmatprep.mubr.f32.mxu0 0.0
        %856 = vmatmul.mubr.f32.gmra.mrb[0].mxu0 %v762
        %v857 = vpop.f32.mrb[0].mxu0
        %v858 = vadd.f32 %v784, %v857
        %v859 = vpop.f32.mrb[0].mxu0
        %860 = vdwg.mxu0
        %v861 = vmul.f32 %v853, 0.5
        %v862 = vmul.f32 %v858, 0.5
        %v863 = vmul.f32 %v853, 0.70710677
        %v864 = vmul.f32 %v858, 0.70710677
        %v865 = vand.u32 2147483647, %v863
        %v866 = vand.u32 2147483647, %v864
        %v867 = vmul.f32 %v865, 0.3275911
        %v868 = vmul.f32 %v866, 0.3275911
        %v869 = vadd.f32 %v867, 1.0
        %v870 = vadd.f32 %v868, 1.0
        %v871 = vrcp.pop %v869
        %v872 = vrcp.pop %v870
        %v873 = vmul.f32 %v871, 1.0614054
        %v874 = vmul.f32 %v872, 1.0614054
        %v875 = vadd.f32 %v873, -1.4531521
        %v876 = vadd.f32 %v874, -1.4531521
        %v877 = vmul.f32 %v875, %v871
        %v878 = vmul.f32 %v876, %v872
        %v879 = vadd.f32 %v877, 1.4214138
        %v880 = vadd.f32 %v878, 1.4214138
        %v881 = vmul.f32 %v879, %v871
        %v882 = vmul.f32 %v880, %v872
        %v883 = vadd.f32 %v881, -0.28449672
        %v884 = vadd.f32 %v882, -0.28449672
        %v885 = vmul.f32 %v883, %v871
        %v886 = vmul.f32 %v884, %v872
        %v887 = vadd.f32 %v885, 0.2548296
        %v888 = vadd.f32 %v886, 0.2548296
        %v889 = vmul.f32 %v887, %v871
        %v890 = vmul.f32 %v888, %v872
        %v891 = vsub.f32 0.0, %v865
        %v892 = vsub.f32 0.0, %v866
        %v893 = vmul.f32 %v891, %v865
        %v894 = vmul.f32 %v892, %v866
        %v895 = vmul.f32 %v893, 1.442695
        %v896 = vpow.pop %v895
        %v897 = vmul.f32 %v894, 1.442695
        %v898 = vpow.pop %v897
        %v899 = vmul.f32 %v889, %v896
        %v900 = vmul.f32 %v890, %v898
        %v901 = vsub.f32 1.0, %v899
        %v902 = vsub.f32 1.0, %v900
        %vm903 = vcmp.ge.f32.partialorder %v863, 0.0
        %vm904 = vcmp.ge.f32.partialorder %v864, 0.0
        %v905 = vsub.f32 0.0, %v901
        %v906 = vsub.f32 0.0, %v902
        %v907 = vsel %vm903, %v901, %v905
        %v908 = vsel %vm904, %v902, %v906
        %v909 = vadd.f32 %v907, 1.0
        %v910 = vadd.f32 %v908, 1.0
        %v911 = vmul.f32 %v861, %v909
        %v912 = vmul.f32 %v862, %v910
        %v913 = vld [vmem:[#allocation7] sm:$0xff]
        %v914 = vld [vmem:[#allocation7 + $0x8] sm:$0xff]
        %v915 = vld [vmem:[#allocation7 + $0x10] sm:$0xff]
        %v916 = vld [vmem:[#allocation7 + $0x18] sm:$0xff]
        %v917 = vld [vmem:[#allocation7 + $0x20] sm:$0xff]
        %v918 = vld [vmem:[#allocation7 + $0x28] sm:$0xff]
        %v919 = vld [vmem:[#allocation7 + $0x30] sm:$0xff]
        %v920 = vld [vmem:[#allocation7 + $0x38] sm:$0xff]
        %v921 = vld [vmem:[#allocation7 + $0x40] sm:$0xff]
        %v922 = vld [vmem:[#allocation7 + $0x48] sm:$0xff]
        %v923 = vld [vmem:[#allocation7 + $0x50] sm:$0xff]
        %v924 = vld [vmem:[#allocation7 + $0x58] sm:$0xff]
        %v925 = vld [vmem:[#allocation7 + $0x60] sm:$0xff]
        %v926 = vld [vmem:[#allocation7 + $0x68] sm:$0xff]
        %v927 = vld [vmem:[#allocation7 + $0x70] sm:$0xff]
        %v928 = vld [vmem:[#allocation7 + $0x78] sm:$0xff]
        %v929 = vld [vmem:[%s10] sm:$0x1]
        %v931 = vlaneseq
        %v932 = vshrl.u32 %v931, 7
        %v933 = vsub.s32 0, %v932
        %v934 = vrot.slane %v929, %v933
        %936 = vmatprep.subr.mxu0 0.0
        %937 = vmatpush1.msra.mxu0 %v913
        %938 = vmatprep.subr.mxu0 0.0
        %939 = vmatpush1.msra.mxu0 %v914
        %940 = vmatprep.subr.mxu0 0.0
        %941 = vmatpush1.msra.mxu0 %v915
        %942 = vmatprep.subr.mxu0 0.0
        %943 = vmatpush1.msra.mxu0 %v916
        %944 = vmatprep.subr.mxu0 0.0
        %945 = vmatpush1.msra.mxu0 %v917
        %946 = vmatprep.subr.mxu0 0.0
        %947 = vmatpush1.msra.mxu0 %v918
        %948 = vmatprep.subr.mxu0 0.0
        %949 = vmatpush1.msra.mxu0 %v919
        %950 = vmatprep.subr.mxu0 0.0
        %951 = vmatpush1.msra.mxu0 %v920
        %952 = vmatprep.subr.mxu0 0.0
        %953 = vmatpush1.msra.mxu0 %v921
        %954 = vmatprep.subr.mxu0 0.0
        %955 = vmatpush1.msra.mxu0 %v922
        %956 = vmatprep.subr.mxu0 0.0
        %957 = vmatpush1.msra.mxu0 %v923
        %958 = vmatprep.subr.mxu0 0.0
        %959 = vmatpush1.msra.mxu0 %v924
        %960 = vmatprep.subr.mxu0 0.0
        %961 = vmatpush1.msra.mxu0 %v925
        %962 = vmatprep.subr.mxu0 0.0
        %963 = vmatpush1.msra.mxu0 %v926
        %964 = vmatprep.subr.mxu0 0.0
        %965 = vmatpush1.msra.mxu0 %v927
        %966 = vmatprep.subr.mxu0 0.0
        %967 = vmatpush1.msra.mxu0 %v928
        %968 = vmatprep.subr.mxu0 0.0
        %969 = vmatpush1.msra.mxu0 0.0
        %970 = vmatprep.subr.mxu0 0.0
        %971 = vmatpush1.msra.mxu0 0.0
        %972 = vmatprep.subr.mxu0 0.0
        %973 = vmatpush1.msra.mxu0 0.0
        %974 = vmatprep.subr.mxu0 0.0
        %975 = vmatpush1.msra.mxu0 0.0
        %976 = vmatprep.subr.mxu0 0.0
        %977 = vmatpush1.msra.mxu0 0.0
        %978 = vmatprep.subr.mxu0 0.0
        %979 = vmatpush1.msra.mxu0 0.0
        %980 = vmatprep.subr.mxu0 0.0
        %981 = vmatpush1.msra.mxu0 0.0
        %982 = vmatprep.subr.mxu0 0.0
        %983 = vmatpush1.msra.mxu0 0.0
        %984 = vmatprep.subr.mxu0 0.0
        %985 = vmatpush1.msra.mxu0 0.0
        %986 = vmatprep.subr.mxu0 0.0
        %987 = vmatpush1.msra.mxu0 0.0
        %988 = vmatprep.subr.mxu0 0.0
        %989 = vmatpush1.msra.mxu0 0.0
        %990 = vmatprep.subr.mxu0 0.0
        %991 = vmatpush1.msra.mxu0 0.0
        %992 = vmatprep.subr.mxu0 0.0
        %993 = vmatpush1.msra.mxu0 0.0
        %994 = vmatprep.subr.mxu0 0.0
        %995 = vmatpush1.msra.mxu0 0.0
        %996 = vmatprep.subr.mxu0 0.0
        %997 = vmatpush1.msra.mxu0 0.0
        %998 = vmatprep.subr.mxu0 0.0
        %999 = vmatpush1.msra.mxu0 0.0
        %1000 = vmatprep.mubr.f32.mxu0 0.0
        %1001 = vmatmul.mubr.f32.gmra.mrb[0].mxu0 %v911
        %v1002 = vpop.f32.mrb[0].mxu0
        %v1003 = vadd.f32 %v934, %v1002
        %v1004 = vpop.f32.mrb[0].mxu0
        %1005 = vmatprep.mubr.f32.mxu0 0.0
        %1006 = vmatmul.mubr.f32.gmra.mrb[0].mxu0 %v912
        %v1007 = vpop.f32.mrb[0].mxu0
        %v1008 = vadd.f32 %v934, %v1007
        %v1009 = vpop.f32.mrb[0].mxu0
        %1010 = vdwg.mxu0
        %vm1013 = vcmask 1040384
        %v1014 = vrot.slane %v1003, 7
        %v1015 = vrot.slane %v1008, 7
        %v1016 = vsel %vm1013, %v1014, %v1015
        %v1020 = vadd.f32 %v458, %v1014
        %v1021 = vadd.f32 %v459, %v1016
        %v1022 = vadd.f32 %v460, %v1015
        %1023 = vst [vmem:[%s447 - $0x1] sm:$0xfe] %v1020
        %1024 = vst [vmem:[%s447 + $0x7] sm:$0xff] %v1021
        %1025 = vst [vmem:[%s447 + $0xf] sm:$0x1] %v1022
        %s1026 = sand.u32 %s287, 1
        %s1027 = scalar_lea.sflag [#allocation4], %s1026
        %s1028 = sand.u32 %s287, 1
        %s1029 = smul.addr %s1028, 16
        %s1030 = scalar_lea.vmem [#allocation8], %s1029
        // Predicated region
        $region77: #{tpu_custom_call.1} parent=63 // pred_check
          %p1031 = pneg %p297
        $region78: #{tpu_custom_call.1} parent=63 // pred_check_branch
          %1033 = sbr.rel (%p1031) target = $region80
        $region79: #{tpu_custom_call.1} parent=63 // pred_region
          %s1034 = smul.u32 2, %s32
          %s1036 = ssub.s32 256, 256
          %1037 = vsyncadd %s1027, %s1036
          %s1038 = smul.addr %s31, 2
          %s1039 = sadd.s32 %s1034, %s1038
          %s1040 = smul.addr %s1039, 128
          %s1041 = scalar_lea.hbm %s11, %s1040
          %s1042 = sshll.u32 %s1030, 4
          %s1043 = int_to_ptr.vmem [resolvable:$true] %s1042
          %1048 = dma.vmem_to_hbm [thread:$0]  %s1043, 256, %s1041, %s1027, 128, 128, 8
        $region80: #{tpu_custom_call.1} parent=63 // pred_fallthru
          _
      $region64: #{tpu_custom_call.1} parent=5 // pred_fallthru
        _
      %p1049 = scmp.le.s32.totalorder 2, %s22
      // Predicated region
      $region81: #{tpu_custom_call.1} parent=5 // pred_check
        %p1050 = pneg %p1049
      $region82: #{tpu_custom_call.1} parent=5 // pred_check_branch
        %1052 = sbr.rel (%p1050) target = $region84
      $region83: #{tpu_custom_call.1} parent=5 // pred_region
        %s1053 = ssub.s32 %s22, 2
        // Predicated region
        $region85: #{tpu_custom_call.1} parent=83 // pred_check
          %p1054 = pneg %p303
        $region86: #{tpu_custom_call.1} parent=83 // pred_check_branch
          %1056 = sbr.rel (%p1054) target = $region88
        $region87: #{tpu_custom_call.1} parent=83 // pred_region
          %s1057 = sand.u32 %s288, 1
          %s1058 = scalar_lea.sflag [#allocation4], %s1057
          %s1059 = sand.u32 %s288, 1
          %s1060 = smul.addr %s1059, 16
          %s1061 = scalar_lea.vmem [#allocation8], %s1060
          %1062 = dma.done %s1058, 256
        $region88: #{tpu_custom_call.1} parent=83 // pred_fallthru
          _
      $region84: #{tpu_custom_call.1} parent=5 // pred_fallthru
        _
    $region6: #{tpu_custom_call.1} parent=1 // loop_footer
      %s26 = sadd.s32 1, %s22
    $region7: #{tpu_custom_call.1} parent=1 // loop_footer_branch
      %21 = sbr.rel target = $region3
    $region8: #{tpu_custom_call.1} parent=1 // loop_exit
      _
    %1063 = vsyncpa [#allocation3], 1
    %s1064 = scalar_lea.sflag [#allocation3], 1
    %1065 = vsyncpa %s1064, 1
    %1066 = vsyncpa [#allocation6], 1
    %1067 = vsyncpa [#allocation4], 1
    %s1068 = scalar_lea.sflag [#allocation4], 1
    %1069 = vsyncpa %s1068, 1

</llo_original>
